<compile_context>
chip_gen: v5e
topology: v5e:2x2
jax: 0.10.0
libtpu: 0.0.40
codegen_flags: <defaults>
</compile_context>

<pallas_src>
import numpy as np
import jax
import jax.numpy as jnp
from jax.experimental import pallas as pl
from jax.experimental.pallas import tpu as pltpu

# ----- AudioAttNet default config -----
SEQ_LEN = 8
DIM_AUD = 32
CONV_CH = (DIM_AUD, 16, 8, 4, 2, 1)     # Conv1d channel chain
N_CONV = len(CONV_CH) - 1               # 5 conv layers
SLOPE = 0.02                            # LeakyReLU negative slope
CPAD = 128                              # lane padding for every feature dim


# ---------------------------------------------------------------------------
# Kernel: WB audio windows per grid step, packed as consecutive 8-row groups
# on the sublane axis.
# ---------------------------------------------------------------------------
def audio_att_kernel(x_ref, wbd_ref, wc_ref, bc_ref, bl_ref, out_ref):
    wb = x_ref.shape[0]                       # windows in this block (static)
    rows = wb * SEQ_LEN
    x3 = x_ref[...]                           # (WB, 8, CPAD)
    h = x3.reshape(rows, CPAD)                # layout no-op: (WB*8, CPAD)

    # Per-row window-boundary masks (t = row index within its 8-step window).
    # Computed once, reused by every conv layer.
    t_idx = jax.lax.broadcasted_iota(jnp.int32, (rows, 1), 0) & (SEQ_LEN - 1)
    mask_prev = jnp.where(t_idx > 0, 1.0, 0.0).astype(jnp.float32)
    mask_next = jnp.where(t_idx < SEQ_LEN - 1, 1.0, 0.0).astype(jnp.float32)

    # Conv1d(k=3, pad=1) + LeakyReLU(0.02): three tap dots per layer; the
    # +/-1 time shift is an XLU sublane roll, masked at window boundaries.
    for l in range(N_CONV):
        h_m1 = pltpu.roll(h, 1, 0) * mask_prev          # row r <- h[r-1]
        h_p1 = pltpu.roll(h, rows - 1, 0) * mask_next   # row r <- h[r+1]
        z = (jnp.dot(h_m1, wc_ref[3 * l + 0], preferred_element_type=jnp.float32)
             + jnp.dot(h,   wc_ref[3 * l + 1], preferred_element_type=jnp.float32)
             + jnp.dot(h_p1, wc_ref[3 * l + 2], preferred_element_type=jnp.float32)
             + bc_ref[l])
        h = jnp.where(z > 0.0, z, SLOPE * z)            # LeakyReLU(0.02)

    # attentionNet: block-diagonal Linear(seq->seq) over all windows at once,
    # then a per-window (grouped) softmax over the 8 seq rows.
    logits = jnp.dot(wbd_ref[...], h, preferred_element_type=jnp.float32)
    logits3 = logits.reshape(wb, SEQ_LEN, CPAD) + bl_ref[...]   # bias in lane 0
    m = jnp.max(logits3, axis=1, keepdims=True)
    e = jnp.exp(logits3 - m)
    s = jnp.sum(e, axis=1, keepdims=True)
    attn = e * pl.reciprocal(s, approx=True)            # lane 0 = softmax weights

    # out[w, d] = sum_t attn[w, t] * x[w, t, d]   -> dense (WB, 128) store
    out_ref[...] = jnp.sum(attn[:, :, 0:1] * x3, axis=1)


# ---------------------------------------------------------------------------
# Parameter init (PyTorch-style uniform(+-1/sqrt(fan_in)), deterministic)
# ---------------------------------------------------------------------------
def init_params(key):
    params = {"conv": []}
    keys = jax.random.split(key, N_CONV + 1)
    for l in range(N_CONV):
        cin, cout = CONV_CH[l], CONV_CH[l + 1]
        kw, kb = jax.random.split(keys[l])
        bound = 1.0 / np.sqrt(cin * 3)                  # fan_in = cin * kernel
        w = jax.random.uniform(kw, (cout, cin, 3), jnp.float32, -bound, bound)
        b = jax.random.uniform(kb, (cout,), jnp.float32, -bound, bound)
        params["conv"].append((w, b))
    kw, kb = jax.random.split(keys[N_CONV])
    bound = 1.0 / np.sqrt(SEQ_LEN)
    wl = jax.random.uniform(kw, (SEQ_LEN, SEQ_LEN), jnp.float32, -bound, bound)
    bl = jax.random.uniform(kb, (SEQ_LEN,), jnp.float32, -bound, bound)
    params["linear"] = (wl, bl)
    return params


# ---------------------------------------------------------------------------
# Host-side packing: lane-padded conv weights (stored (in, out)) and the
# block-diagonal attention weight kron(I_WB, W_linear).
# ---------------------------------------------------------------------------
def pack_params(params, wb):
    wc = np.zeros((N_CONV * 3, CPAD, CPAD), np.float32)
    bc = np.zeros((N_CONV, 1, CPAD), np.float32)
    for l, (w, b) in enumerate(params["conv"]):
        w = np.asarray(w)
        cout, cin, _ = w.shape
        for k in range(3):
            wc[3 * l + k, :cin, :cout] = w[:, :, k].T
        bc[l, 0, :cout] = np.asarray(b)
    wl, bl = params["linear"]
    wbd = np.kron(np.eye(wb, dtype=np.float32), np.asarray(wl, np.float32))
    blp = np.zeros((SEQ_LEN, CPAD), np.float32)
    blp[:, 0] = np.asarray(bl)
    return jnp.asarray(wc), jnp.asarray(bc), jnp.asarray(wbd), jnp.asarray(blp)


# ---------------------------------------------------------------------------
# Wrapper
# ---------------------------------------------------------------------------
def audio_att_net_pallas(x, params, *, max_windows_per_block=32):
    """x: (seq_len, dim_x) or (B, seq_len, dim_x) with dim_aud <= dim_x <= 128.

    max_windows_per_block must be a multiple of 8 (so multi-block output
    blocks are sublane-aligned); 32 -> 256-row activation slabs (fills the
    2x256 MXU on v6e/v7x, two passes on v5e's 128^2 MXU).
    """
    assert max_windows_per_block % 8 == 0
    single = (x.ndim == 2)
    xb = x[None] if single else x
    B, S, DX = xb.shape
    assert S == SEQ_LEN and DIM_AUD <= DX <= CPAD

    wb = B if B <= max_windows_per_block else max_windows_per_block
    n_blocks = pl.cdiv(B, wb)
    b_pad = n_blocks * wb
    rows = wb * SEQ_LEN

    xp = jnp.pad(xb.astype(jnp.float32),
                 ((0, b_pad - B), (0, 0), (0, CPAD - DX)))
    wc, bc, wbd, blp = pack_params(params, wb)

    out = pl.pallas_call(
        audio_att_kernel,
        out_shape=jax.ShapeDtypeStruct((b_pad, CPAD), jnp.float32),
        grid_spec=pltpu.PrefetchScalarGridSpec(
            num_scalar_prefetch=0,
            grid=(n_blocks,),
            in_specs=[
                pl.BlockSpec((wb, SEQ_LEN, CPAD), lambda i: (i, 0, 0)),     # x
                pl.BlockSpec((rows, rows), lambda i: (0, 0)),               # kron(I,Wlin)
                pl.BlockSpec((N_CONV * 3, CPAD, CPAD), lambda i: (0, 0, 0)),# conv W
                pl.BlockSpec((N_CONV, 1, CPAD), lambda i: (0, 0, 0)),       # conv b
                pl.BlockSpec((SEQ_LEN, CPAD), lambda i: (0, 0)),            # linear b
            ],
            out_specs=pl.BlockSpec((wb, CPAD), lambda i: (i, 0)),
        ),
        compiler_params=pltpu.CompilerParams(dimension_semantics=("parallel",)),
    )(xp, wbd, wc, bc, blp)
    res = out[:B, :DX]
    return res[0] if single else res


# ---------------------------------------------------------------------------
# Pure-JAX reference mirroring the PyTorch forward exactly (single window)
# ---------------------------------------------------------------------------
def audio_att_ref(x, params):
    h = x[:, :DIM_AUD].T                                  # (C, T)
    for w, b in params["conv"]:
        t = h.shape[1]
        hp = jnp.pad(h, ((0, 0), (1, 1)))
        h = (jnp.dot(w[:, :, 0], hp[:, 0:t])
             + jnp.dot(w[:, :, 1], hp[:, 1:t + 1])
             + jnp.dot(w[:, :, 2], hp[:, 2:t + 2]) + b[:, None])
        h = jnp.where(h > 0.0, h, SLOPE * h)              # LeakyReLU(0.02)
    wl, bl = params["linear"]
    logits = jnp.dot(h.reshape(1, SEQ_LEN), wl.T) + bl
    attn = jax.nn.softmax(logits, axis=1).reshape(SEQ_LEN, 1)
    return jnp.sum(attn * x, axis=0)


# ---------------------------------------------------------------------------
if __name__ == "__main__":
    key = jax.random.PRNGKey(0)
    kx, kp = jax.random.split(key)
    B = 4
    x = jax.random.uniform(kx, (B, SEQ_LEN, DIM_AUD), jnp.float32, -1.0, 1.0)
    params = init_params(kp)

    out = jax.block_until_ready(audio_att_net_pallas(x, params))

    ref = jnp.stack([audio_att_ref(x[b], params) for b in range(B)])
    max_err = float(jnp.max(jnp.abs(out - ref)))
    if out.shape == (B, DIM_AUD) and bool(jnp.allclose(out, ref, atol=1e-3,
                                                       rtol=1e-3)):
        print("KERNEL_OK")
    else:
        print(f"MISMATCH shape={out.shape} max_err={max_err}")
</pallas_src>

<mosaic_0001>
module attributes {stable_mosaic.version = 11 : i64} {
  func.func @audio_att_kernel(%arg0: i32, %arg1: memref<4x8x128xf32, #tpu.memory_space<vmem>>, %arg2: memref<32x32xf32, #tpu.memory_space<vmem>>, %arg3: memref<15x128x128xf32, #tpu.memory_space<vmem>>, %arg4: memref<5x1x128xf32, #tpu.memory_space<vmem>>, %arg5: memref<8x128xf32, #tpu.memory_space<vmem>>, %arg6: memref<4x128xf32, #tpu.memory_space<vmem>>) attributes {dimension_semantics = [#tpu.dimension_semantics<parallel>], iteration_bounds = array<i64: 1>, scalar_prefetch = 0 : i64, scratch_operands = 0 : i64, tpu.core_type = #tpu.core_type<tc>, window_params = [{transform_indices = @transform_0, window_bounds = array<i64: 4, 8, 128>}, {pipeline_mode = #tpu.pipeline_mode<synchronous>, transform_indices = @transform_1, window_bounds = array<i64: 32, 32>}, {pipeline_mode = #tpu.pipeline_mode<synchronous>, transform_indices = @transform_2, window_bounds = array<i64: 15, 128, 128>}, {pipeline_mode = #tpu.pipeline_mode<synchronous>, transform_indices = @transform_3, window_bounds = array<i64: 5, 1, 128>}, {pipeline_mode = #tpu.pipeline_mode<synchronous>, transform_indices = @transform_4, window_bounds = array<i64: 8, 128>}, {transform_indices = @transform_5, window_bounds = array<i64: 4, 128>}]} {
    %c0 = arith.constant 0 : index
    %c0_0 = arith.constant 0 : index
    %c0_1 = arith.constant 0 : index
    %0 = vector.load %arg1[%c0, %c0_0, %c0_1] : memref<4x8x128xf32, #tpu.memory_space<vmem>>, vector<4x8x128xf32>
    %1 = vector.shape_cast %0 : vector<4x8x128xf32> to vector<32x128xf32>
    %2 = tpu.iota {dimensions = array<i32: 0>} : vector<32x1xi32>
    %c7_i32 = arith.constant 7 : i32
    %3 = vector.broadcast %c7_i32 : i32 to vector<32x1xi32>
    %4 = arith.andi %2, %3 : vector<32x1xi32>
    %c0_i32 = arith.constant 0 : i32
    %5 = vector.broadcast %c0_i32 : i32 to vector<32x1xi32>
    %6 = arith.cmpi sgt, %4, %5 : vector<32x1xi32>
    %cst = arith.constant 1.000000e+00 : f32
    %cst_2 = arith.constant 0.000000e+00 : f32
    %7 = vector.broadcast %cst : f32 to vector<32x1xf32>
    %8 = vector.broadcast %cst_2 : f32 to vector<32x1xf32>
    %9 = arith.select %6, %7, %8 : vector<32x1xi1>, vector<32x1xf32>
    %c7_i32_3 = arith.constant 7 : i32
    %10 = vector.broadcast %c7_i32_3 : i32 to vector<32x1xi32>
    %11 = arith.cmpi slt, %4, %10 : vector<32x1xi32>
    %cst_4 = arith.constant 1.000000e+00 : f32
    %cst_5 = arith.constant 0.000000e+00 : f32
    %12 = vector.broadcast %cst_4 : f32 to vector<32x1xf32>
    %13 = vector.broadcast %cst_5 : f32 to vector<32x1xf32>
    %14 = arith.select %11, %12, %13 : vector<32x1xi1>, vector<32x1xf32>
    %c1_i32 = arith.constant 1 : i32
    %15 = tpu.dynamic_rotate %1 by %c1_i32 dim 0 : vector<32x128xf32>, i32 -> vector<32x128xf32>
    %16 = vector.broadcast %9 : vector<32x1xf32> to vector<32x128xf32>
    %17 = arith.mulf %15, %16 : vector<32x128xf32>
    %c31_i32 = arith.constant 31 : i32
    %18 = tpu.dynamic_rotate %1 by %c31_i32 dim 0 : vector<32x128xf32>, i32 -> vector<32x128xf32>
    %19 = vector.broadcast %14 : vector<32x1xf32> to vector<32x128xf32>
    %20 = arith.mulf %18, %19 : vector<32x128xf32>
    %c0_6 = arith.constant 0 : index
    %c0_7 = arith.constant 0 : index
    %c0_8 = arith.constant 0 : index
    %21 = vector.load %arg3[%c0_6, %c0_7, %c0_8] : memref<15x128x128xf32, #tpu.memory_space<vmem>>, vector<1x128x128xf32>
    %22 = vector.shape_cast %21 : vector<1x128x128xf32> to vector<128x128xf32>
    %cst_9 = arith.constant dense<0.000000e+00> : vector<32x128xf32>
    %23 = tpu.matmul %17, %22, %cst_9 {dimension_numbers = #tpu.dot_dimension_numbers<[1], [0], [0], [1], [0, 0, 1, 1], [], []>} : vector<32x128xf32>, vector<128x128xf32>, vector<32x128xf32> -> vector<32x128xf32>
    %c1 = arith.constant 1 : index
    %c0_10 = arith.constant 0 : index
    %c0_11 = arith.constant 0 : index
    %24 = vector.load %arg3[%c1, %c0_10, %c0_11] : memref<15x128x128xf32, #tpu.memory_space<vmem>>, vector<1x128x128xf32>
    %25 = vector.shape_cast %24 : vector<1x128x128xf32> to vector<128x128xf32>
    %cst_12 = arith.constant dense<0.000000e+00> : vector<32x128xf32>
    %26 = tpu.matmul %1, %25, %cst_12 {dimension_numbers = #tpu.dot_dimension_numbers<[1], [0], [0], [1], [0, 0, 1, 1], [], []>} : vector<32x128xf32>, vector<128x128xf32>, vector<32x128xf32> -> vector<32x128xf32>
    %27 = arith.addf %23, %26 : vector<32x128xf32>
    %c2 = arith.constant 2 : index
    %c0_13 = arith.constant 0 : index
    %c0_14 = arith.constant 0 : index
    %28 = vector.load %arg3[%c2, %c0_13, %c0_14] : memref<15x128x128xf32, #tpu.memory_space<vmem>>, vector<1x128x128xf32>
    %29 = vector.shape_cast %28 : vector<1x128x128xf32> to vector<128x128xf32>
    %cst_15 = arith.constant dense<0.000000e+00> : vector<32x128xf32>
    %30 = tpu.matmul %20, %29, %cst_15 {dimension_numbers = #tpu.dot_dimension_numbers<[1], [0], [0], [1], [0, 0, 1, 1], [], []>} : vector<32x128xf32>, vector<128x128xf32>, vector<32x128xf32> -> vector<32x128xf32>
    %31 = arith.addf %27, %30 : vector<32x128xf32>
    %c0_16 = arith.constant 0 : index
    %c0_17 = arith.constant 0 : index
    %c0_18 = arith.constant 0 : index
    %32 = vector.load %arg4[%c0_16, %c0_17, %c0_18] : memref<5x1x128xf32, #tpu.memory_space<vmem>>, vector<1x1x128xf32>
    %33 = vector.shape_cast %32 : vector<1x1x128xf32> to vector<1x128xf32>
    %34 = vector.broadcast %33 : vector<1x128xf32> to vector<32x128xf32>
    %35 = arith.addf %31, %34 : vector<32x128xf32>
    %cst_19 = arith.constant 0.000000e+00 : f32
    %36 = vector.broadcast %cst_19 : f32 to vector<32x128xf32>
    %37 = arith.cmpf ogt, %35, %36 : vector<32x128xf32>
    %cst_20 = arith.constant 2.000000e-02 : f32
    %38 = vector.broadcast %cst_20 : f32 to vector<32x128xf32>
    %39 = arith.mulf %38, %35 : vector<32x128xf32>
    %40 = arith.select %37, %35, %39 : vector<32x128xi1>, vector<32x128xf32>
    %c1_i32_21 = arith.constant 1 : i32
    %41 = tpu.dynamic_rotate %40 by %c1_i32_21 dim 0 : vector<32x128xf32>, i32 -> vector<32x128xf32>
    %42 = vector.broadcast %9 : vector<32x1xf32> to vector<32x128xf32>
    %43 = arith.mulf %41, %42 : vector<32x128xf32>
    %c31_i32_22 = arith.constant 31 : i32
    %44 = tpu.dynamic_rotate %40 by %c31_i32_22 dim 0 : vector<32x128xf32>, i32 -> vector<32x128xf32>
    %45 = vector.broadcast %14 : vector<32x1xf32> to vector<32x128xf32>
    %46 = arith.mulf %44, %45 : vector<32x128xf32>
    %c3 = arith.constant 3 : index
    %c0_23 = arith.constant 0 : index
    %c0_24 = arith.constant 0 : index
    %47 = vector.load %arg3[%c3, %c0_23, %c0_24] : memref<15x128x128xf32, #tpu.memory_space<vmem>>, vector<1x128x128xf32>
    %48 = vector.shape_cast %47 : vector<1x128x128xf32> to vector<128x128xf32>
    %cst_25 = arith.constant dense<0.000000e+00> : vector<32x128xf32>
    %49 = tpu.matmul %43, %48, %cst_25 {dimension_numbers = #tpu.dot_dimension_numbers<[1], [0], [0], [1], [0, 0, 1, 1], [], []>} : vector<32x128xf32>, vector<128x128xf32>, vector<32x128xf32> -> vector<32x128xf32>
    %c4 = arith.constant 4 : index
    %c0_26 = arith.constant 0 : index
    %c0_27 = arith.constant 0 : index
    %50 = vector.load %arg3[%c4, %c0_26, %c0_27] : memref<15x128x128xf32, #tpu.memory_space<vmem>>, vector<1x128x128xf32>
    %51 = vector.shape_cast %50 : vector<1x128x128xf32> to vector<128x128xf32>
    %cst_28 = arith.constant dense<0.000000e+00> : vector<32x128xf32>
    %52 = tpu.matmul %40, %51, %cst_28 {dimension_numbers = #tpu.dot_dimension_numbers<[1], [0], [0], [1], [0, 0, 1, 1], [], []>} : vector<32x128xf32>, vector<128x128xf32>, vector<32x128xf32> -> vector<32x128xf32>
    %53 = arith.addf %49, %52 : vector<32x128xf32>
    %c5 = arith.constant 5 : index
    %c0_29 = arith.constant 0 : index
    %c0_30 = arith.constant 0 : index
    %54 = vector.load %arg3[%c5, %c0_29, %c0_30] : memref<15x128x128xf32, #tpu.memory_space<vmem>>, vector<1x128x128xf32>
    %55 = vector.shape_cast %54 : vector<1x128x128xf32> to vector<128x128xf32>
    %cst_31 = arith.constant dense<0.000000e+00> : vector<32x128xf32>
    %56 = tpu.matmul %46, %55, %cst_31 {dimension_numbers = #tpu.dot_dimension_numbers<[1], [0], [0], [1], [0, 0, 1, 1], [], []>} : vector<32x128xf32>, vector<128x128xf32>, vector<32x128xf32> -> vector<32x128xf32>
    %57 = arith.addf %53, %56 : vector<32x128xf32>
    %c1_32 = arith.constant 1 : index
    %c0_33 = arith.constant 0 : index
    %c0_34 = arith.constant 0 : index
    %58 = vector.load %arg4[%c1_32, %c0_33, %c0_34] : memref<5x1x128xf32, #tpu.memory_space<vmem>>, vector<1x1x128xf32>
    %59 = vector.shape_cast %58 : vector<1x1x128xf32> to vector<1x128xf32>
    %60 = vector.broadcast %59 : vector<1x128xf32> to vector<32x128xf32>
    %61 = arith.addf %57, %60 : vector<32x128xf32>
    %cst_35 = arith.constant 0.000000e+00 : f32
    %62 = vector.broadcast %cst_35 : f32 to vector<32x128xf32>
    %63 = arith.cmpf ogt, %61, %62 : vector<32x128xf32>
    %cst_36 = arith.constant 2.000000e-02 : f32
    %64 = vector.broadcast %cst_36 : f32 to vector<32x128xf32>
    %65 = arith.mulf %64, %61 : vector<32x128xf32>
    %66 = arith.select %63, %61, %65 : vector<32x128xi1>, vector<32x128xf32>
    %c1_i32_37 = arith.constant 1 : i32
    %67 = tpu.dynamic_rotate %66 by %c1_i32_37 dim 0 : vector<32x128xf32>, i32 -> vector<32x128xf32>
    %68 = vector.broadcast %9 : vector<32x1xf32> to vector<32x128xf32>
    %69 = arith.mulf %67, %68 : vector<32x128xf32>
    %c31_i32_38 = arith.constant 31 : i32
    %70 = tpu.dynamic_rotate %66 by %c31_i32_38 dim 0 : vector<32x128xf32>, i32 -> vector<32x128xf32>
    %71 = vector.broadcast %14 : vector<32x1xf32> to vector<32x128xf32>
    %72 = arith.mulf %70, %71 : vector<32x128xf32>
    %c6 = arith.constant 6 : index
    %c0_39 = arith.constant 0 : index
    %c0_40 = arith.constant 0 : index
    %73 = vector.load %arg3[%c6, %c0_39, %c0_40] : memref<15x128x128xf32, #tpu.memory_space<vmem>>, vector<1x128x128xf32>
    %74 = vector.shape_cast %73 : vector<1x128x128xf32> to vector<128x128xf32>
    %cst_41 = arith.constant dense<0.000000e+00> : vector<32x128xf32>
    %75 = tpu.matmul %69, %74, %cst_41 {dimension_numbers = #tpu.dot_dimension_numbers<[1], [0], [0], [1], [0, 0, 1, 1], [], []>} : vector<32x128xf32>, vector<128x128xf32>, vector<32x128xf32> -> vector<32x128xf32>
    %c7 = arith.constant 7 : index
    %c0_42 = arith.constant 0 : index
    %c0_43 = arith.constant 0 : index
    %76 = vector.load %arg3[%c7, %c0_42, %c0_43] : memref<15x128x128xf32, #tpu.memory_space<vmem>>, vector<1x128x128xf32>
    %77 = vector.shape_cast %76 : vector<1x128x128xf32> to vector<128x128xf32>
    %cst_44 = arith.constant dense<0.000000e+00> : vector<32x128xf32>
    %78 = tpu.matmul %66, %77, %cst_44 {dimension_numbers = #tpu.dot_dimension_numbers<[1], [0], [0], [1], [0, 0, 1, 1], [], []>} : vector<32x128xf32>, vector<128x128xf32>, vector<32x128xf32> -> vector<32x128xf32>
    %79 = arith.addf %75, %78 : vector<32x128xf32>
    %c8 = arith.constant 8 : index
    %c0_45 = arith.constant 0 : index
    %c0_46 = arith.constant 0 : index
    %80 = vector.load %arg3[%c8, %c0_45, %c0_46] : memref<15x128x128xf32, #tpu.memory_space<vmem>>, vector<1x128x128xf32>
    %81 = vector.shape_cast %80 : vector<1x128x128xf32> to vector<128x128xf32>
    %cst_47 = arith.constant dense<0.000000e+00> : vector<32x128xf32>
    %82 = tpu.matmul %72, %81, %cst_47 {dimension_numbers = #tpu.dot_dimension_numbers<[1], [0], [0], [1], [0, 0, 1, 1], [], []>} : vector<32x128xf32>, vector<128x128xf32>, vector<32x128xf32> -> vector<32x128xf32>
    %83 = arith.addf %79, %82 : vector<32x128xf32>
    %c2_48 = arith.constant 2 : index
    %c0_49 = arith.constant 0 : index
    %c0_50 = arith.constant 0 : index
    %84 = vector.load %arg4[%c2_48, %c0_49, %c0_50] : memref<5x1x128xf32, #tpu.memory_space<vmem>>, vector<1x1x128xf32>
    %85 = vector.shape_cast %84 : vector<1x1x128xf32> to vector<1x128xf32>
    %86 = vector.broadcast %85 : vector<1x128xf32> to vector<32x128xf32>
    %87 = arith.addf %83, %86 : vector<32x128xf32>
    %cst_51 = arith.constant 0.000000e+00 : f32
    %88 = vector.broadcast %cst_51 : f32 to vector<32x128xf32>
    %89 = arith.cmpf ogt, %87, %88 : vector<32x128xf32>
    %cst_52 = arith.constant 2.000000e-02 : f32
    %90 = vector.broadcast %cst_52 : f32 to vector<32x128xf32>
    %91 = arith.mulf %90, %87 : vector<32x128xf32>
    %92 = arith.select %89, %87, %91 : vector<32x128xi1>, vector<32x128xf32>
    %c1_i32_53 = arith.constant 1 : i32
    %93 = tpu.dynamic_rotate %92 by %c1_i32_53 dim 0 : vector<32x128xf32>, i32 -> vector<32x128xf32>
    %94 = vector.broadcast %9 : vector<32x1xf32> to vector<32x128xf32>
    %95 = arith.mulf %93, %94 : vector<32x128xf32>
    %c31_i32_54 = arith.constant 31 : i32
    %96 = tpu.dynamic_rotate %92 by %c31_i32_54 dim 0 : vector<32x128xf32>, i32 -> vector<32x128xf32>
    %97 = vector.broadcast %14 : vector<32x1xf32> to vector<32x128xf32>
    %98 = arith.mulf %96, %97 : vector<32x128xf32>
    %c9 = arith.constant 9 : index
    %c0_55 = arith.constant 0 : index
    %c0_56 = arith.constant 0 : index
    %99 = vector.load %arg3[%c9, %c0_55, %c0_56] : memref<15x128x128xf32, #tpu.memory_space<vmem>>, vector<1x128x128xf32>
    %100 = vector.shape_cast %99 : vector<1x128x128xf32> to vector<128x128xf32>
    %cst_57 = arith.constant dense<0.000000e+00> : vector<32x128xf32>
    %101 = tpu.matmul %95, %100, %cst_57 {dimension_numbers = #tpu.dot_dimension_numbers<[1], [0], [0], [1], [0, 0, 1, 1], [], []>} : vector<32x128xf32>, vector<128x128xf32>, vector<32x128xf32> -> vector<32x128xf32>
    %c10 = arith.constant 10 : index
    %c0_58 = arith.constant 0 : index
    %c0_59 = arith.constant 0 : index
    %102 = vector.load %arg3[%c10, %c0_58, %c0_59] : memref<15x128x128xf32, #tpu.memory_space<vmem>>, vector<1x128x128xf32>
    %103 = vector.shape_cast %102 : vector<1x128x128xf32> to vector<128x128xf32>
    %cst_60 = arith.constant dense<0.000000e+00> : vector<32x128xf32>
    %104 = tpu.matmul %92, %103, %cst_60 {dimension_numbers = #tpu.dot_dimension_numbers<[1], [0], [0], [1], [0, 0, 1, 1], [], []>} : vector<32x128xf32>, vector<128x128xf32>, vector<32x128xf32> -> vector<32x128xf32>
    %105 = arith.addf %101, %104 : vector<32x128xf32>
    %c11 = arith.constant 11 : index
    %c0_61 = arith.constant 0 : index
    %c0_62 = arith.constant 0 : index
    %106 = vector.load %arg3[%c11, %c0_61, %c0_62] : memref<15x128x128xf32, #tpu.memory_space<vmem>>, vector<1x128x128xf32>
    %107 = vector.shape_cast %106 : vector<1x128x128xf32> to vector<128x128xf32>
    %cst_63 = arith.constant dense<0.000000e+00> : vector<32x128xf32>
    %108 = tpu.matmul %98, %107, %cst_63 {dimension_numbers = #tpu.dot_dimension_numbers<[1], [0], [0], [1], [0, 0, 1, 1], [], []>} : vector<32x128xf32>, vector<128x128xf32>, vector<32x128xf32> -> vector<32x128xf32>
    %109 = arith.addf %105, %108 : vector<32x128xf32>
    %c3_64 = arith.constant 3 : index
    %c0_65 = arith.constant 0 : index
    %c0_66 = arith.constant 0 : index
    %110 = vector.load %arg4[%c3_64, %c0_65, %c0_66] : memref<5x1x128xf32, #tpu.memory_space<vmem>>, vector<1x1x128xf32>
    %111 = vector.shape_cast %110 : vector<1x1x128xf32> to vector<1x128xf32>
    %112 = vector.broadcast %111 : vector<1x128xf32> to vector<32x128xf32>
    %113 = arith.addf %109, %112 : vector<32x128xf32>
    %cst_67 = arith.constant 0.000000e+00 : f32
    %114 = vector.broadcast %cst_67 : f32 to vector<32x128xf32>
    %115 = arith.cmpf ogt, %113, %114 : vector<32x128xf32>
    %cst_68 = arith.constant 2.000000e-02 : f32
    %116 = vector.broadcast %cst_68 : f32 to vector<32x128xf32>
    %117 = arith.mulf %116, %113 : vector<32x128xf32>
    %118 = arith.select %115, %113, %117 : vector<32x128xi1>, vector<32x128xf32>
    %c1_i32_69 = arith.constant 1 : i32
    %119 = tpu.dynamic_rotate %118 by %c1_i32_69 dim 0 : vector<32x128xf32>, i32 -> vector<32x128xf32>
    %120 = vector.broadcast %9 : vector<32x1xf32> to vector<32x128xf32>
    %121 = arith.mulf %119, %120 : vector<32x128xf32>
    %c31_i32_70 = arith.constant 31 : i32
    %122 = tpu.dynamic_rotate %118 by %c31_i32_70 dim 0 : vector<32x128xf32>, i32 -> vector<32x128xf32>
    %123 = vector.broadcast %14 : vector<32x1xf32> to vector<32x128xf32>
    %124 = arith.mulf %122, %123 : vector<32x128xf32>
    %c12 = arith.constant 12 : index
    %c0_71 = arith.constant 0 : index
    %c0_72 = arith.constant 0 : index
    %125 = vector.load %arg3[%c12, %c0_71, %c0_72] : memref<15x128x128xf32, #tpu.memory_space<vmem>>, vector<1x128x128xf32>
    %126 = vector.shape_cast %125 : vector<1x128x128xf32> to vector<128x128xf32>
    %cst_73 = arith.constant dense<0.000000e+00> : vector<32x128xf32>
    %127 = tpu.matmul %121, %126, %cst_73 {dimension_numbers = #tpu.dot_dimension_numbers<[1], [0], [0], [1], [0, 0, 1, 1], [], []>} : vector<32x128xf32>, vector<128x128xf32>, vector<32x128xf32> -> vector<32x128xf32>
    %c13 = arith.constant 13 : index
    %c0_74 = arith.constant 0 : index
    %c0_75 = arith.constant 0 : index
    %128 = vector.load %arg3[%c13, %c0_74, %c0_75] : memref<15x128x128xf32, #tpu.memory_space<vmem>>, vector<1x128x128xf32>
    %129 = vector.shape_cast %128 : vector<1x128x128xf32> to vector<128x128xf32>
    %cst_76 = arith.constant dense<0.000000e+00> : vector<32x128xf32>
    %130 = tpu.matmul %118, %129, %cst_76 {dimension_numbers = #tpu.dot_dimension_numbers<[1], [0], [0], [1], [0, 0, 1, 1], [], []>} : vector<32x128xf32>, vector<128x128xf32>, vector<32x128xf32> -> vector<32x128xf32>
    %131 = arith.addf %127, %130 : vector<32x128xf32>
    %c14 = arith.constant 14 : index
    %c0_77 = arith.constant 0 : index
    %c0_78 = arith.constant 0 : index
    %132 = vector.load %arg3[%c14, %c0_77, %c0_78] : memref<15x128x128xf32, #tpu.memory_space<vmem>>, vector<1x128x128xf32>
    %133 = vector.shape_cast %132 : vector<1x128x128xf32> to vector<128x128xf32>
    %cst_79 = arith.constant dense<0.000000e+00> : vector<32x128xf32>
    %134 = tpu.matmul %124, %133, %cst_79 {dimension_numbers = #tpu.dot_dimension_numbers<[1], [0], [0], [1], [0, 0, 1, 1], [], []>} : vector<32x128xf32>, vector<128x128xf32>, vector<32x128xf32> -> vector<32x128xf32>
    %135 = arith.addf %131, %134 : vector<32x128xf32>
    %c4_80 = arith.constant 4 : index
    %c0_81 = arith.constant 0 : index
    %c0_82 = arith.constant 0 : index
    %136 = vector.load %arg4[%c4_80, %c0_81, %c0_82] : memref<5x1x128xf32, #tpu.memory_space<vmem>>, vector<1x1x128xf32>
    %137 = vector.shape_cast %136 : vector<1x1x128xf32> to vector<1x128xf32>
    %138 = vector.broadcast %137 : vector<1x128xf32> to vector<32x128xf32>
    %139 = arith.addf %135, %138 : vector<32x128xf32>
    %cst_83 = arith.constant 0.000000e+00 : f32
    %140 = vector.broadcast %cst_83 : f32 to vector<32x128xf32>
    %141 = arith.cmpf ogt, %139, %140 : vector<32x128xf32>
    %cst_84 = arith.constant 2.000000e-02 : f32
    %142 = vector.broadcast %cst_84 : f32 to vector<32x128xf32>
    %143 = arith.mulf %142, %139 : vector<32x128xf32>
    %144 = arith.select %141, %139, %143 : vector<32x128xi1>, vector<32x128xf32>
    %c0_85 = arith.constant 0 : index
    %c0_86 = arith.constant 0 : index
    %145 = vector.load %arg2[%c0_85, %c0_86] : memref<32x32xf32, #tpu.memory_space<vmem>>, vector<32x32xf32>
    %cst_87 = arith.constant dense<0.000000e+00> : vector<32x128xf32>
    %146 = tpu.matmul %145, %144, %cst_87 {dimension_numbers = #tpu.dot_dimension_numbers<[1], [0], [0], [1], [0, 0, 1, 1], [], []>} : vector<32x32xf32>, vector<32x128xf32>, vector<32x128xf32> -> vector<32x128xf32>
    %147 = vector.shape_cast %146 : vector<32x128xf32> to vector<4x8x128xf32>
    %c0_88 = arith.constant 0 : index
    %c0_89 = arith.constant 0 : index
    %148 = vector.load %arg5[%c0_88, %c0_89] : memref<8x128xf32, #tpu.memory_space<vmem>>, vector<8x128xf32>
    %149 = vector.shape_cast %148 : vector<8x128xf32> to vector<1x8x128xf32>
    %150 = vector.broadcast %149 : vector<1x8x128xf32> to vector<4x8x128xf32>
    %151 = arith.addf %147, %150 : vector<4x8x128xf32>
    %cst_90 = arith.constant dense<0xFF800000> : vector<4x128xf32>
    %152 = vector.multi_reduction <maximumf>, %151, %cst_90 [1] : vector<4x8x128xf32> to vector<4x128xf32>
    %153 = vector.shape_cast %152 : vector<4x128xf32> to vector<4x1x128xf32>
    %154 = vector.broadcast %153 : vector<4x1x128xf32> to vector<4x8x128xf32>
    %155 = arith.subf %151, %154 : vector<4x8x128xf32>
    %156 = math.exp %155 : vector<4x8x128xf32>
    %cst_91 = arith.constant dense<0.000000e+00> : vector<4x128xf32>
    %157 = vector.multi_reduction <add>, %156, %cst_91 [1] : vector<4x8x128xf32> to vector<4x128xf32>
    %158 = vector.shape_cast %157 : vector<4x128xf32> to vector<4x1x128xf32>
    %159 = tpu.reciprocal %158 {approx = true} : vector<4x1x128xf32> -> vector<4x1x128xf32>
    %160 = vector.broadcast %159 : vector<4x1x128xf32> to vector<4x8x128xf32>
    %161 = arith.mulf %156, %160 : vector<4x8x128xf32>
    %162 = vector.extract_strided_slice %161 {offsets = [0, 0, 0], sizes = [4, 8, 1], strides = [1, 1, 1]} : vector<4x8x128xf32> to vector<4x8x1xf32>
    %163 = vector.broadcast %162 : vector<4x8x1xf32> to vector<4x8x128xf32>
    %164 = arith.mulf %163, %0 : vector<4x8x128xf32>
    %cst_92 = arith.constant dense<0.000000e+00> : vector<4x128xf32>
    %165 = vector.multi_reduction <add>, %164, %cst_92 [1] : vector<4x8x128xf32> to vector<4x128xf32>
    %c0_93 = arith.constant 0 : index
    %c0_94 = arith.constant 0 : index
    %166 = vector.load %arg6[%c0_93, %c0_94] : memref<4x128xf32, #tpu.memory_space<vmem>>, vector<4x128xf32>
    tpu.vector_store %arg6[%c0_93, %c0_94], %165 {strides = array<i32>} : memref<4x128xf32, #tpu.memory_space<vmem>>, vector<4x128xf32>,
    return
  }
  func.func @transform_0(%arg0: i32) -> (i32, i32, i32) {
    %c0_i32 = arith.constant 0 : i32
    %c0_i32_0 = arith.constant 0 : i32
    %c0_i32_1 = arith.constant 0 : i32
    return %arg0, %c0_i32, %c0_i32_0 : i32, i32, i32
  }
  func.func @transform_1(%arg0: i32) -> (i32, i32) {
    %c0_i32 = arith.constant 0 : i32
    %c0_i32_0 = arith.constant 0 : i32
    %c0_i32_1 = arith.constant 0 : i32
    return %c0_i32, %c0_i32_0 : i32, i32
  }
  func.func @transform_2(%arg0: i32) -> (i32, i32, i32) {
    %c0_i32 = arith.constant 0 : i32
    %c0_i32_0 = arith.constant 0 : i32
    %c0_i32_1 = arith.constant 0 : i32
    %c0_i32_2 = arith.constant 0 : i32
    return %c0_i32, %c0_i32_0, %c0_i32_1 : i32, i32, i32
  }
  func.func @transform_3(%arg0: i32) -> (i32, i32, i32) {
    %c0_i32 = arith.constant 0 : i32
    %c0_i32_0 = arith.constant 0 : i32
    %c0_i32_1 = arith.constant 0 : i32
    %c0_i32_2 = arith.constant 0 : i32
    return %c0_i32, %c0_i32_0, %c0_i32_1 : i32, i32, i32
  }
  func.func @transform_4(%arg0: i32) -> (i32, i32) {
    %c0_i32 = arith.constant 0 : i32
    %c0_i32_0 = arith.constant 0 : i32
    %c0_i32_1 = arith.constant 0 : i32
    return %c0_i32, %c0_i32_0 : i32, i32
  }
  func.func @transform_5(%arg0: i32) -> (i32, i32) {
    %c0_i32 = arith.constant 0 : i32
    %c0_i32_0 = arith.constant 0 : i32
    return %arg0, %c0_i32 : i32, i32
  }
}

</mosaic_0001>

<llo_original>
// kernel: tpu_custom_call.1
$region0: #{tpu_custom_call.1}
  #allocation0 [shape = 'u32[]', space=smem, size = 0x4, offset = 0x4, fixed_abs, tag = 'smem constant byte address 0x4 - core index']
  #allocation1 [shape = 'u32[72,128]{1,0:T(1,128)}', space=vmem, size = 0x9000, scoped, tag = 'internal scratch']
  %s0 = inlined_call_operand.hbm [shape: f32[4,8,128], index: 0, kind: input, shape index: {}]
  %s1 = inlined_call_operand.hbm [shape: f32[32,32], index: 1, kind: input, shape index: {}]
  %s2 = inlined_call_operand.hbm [shape: f32[15,128,128], index: 2, kind: input, shape index: {}]
  %s3 = inlined_call_operand.hbm [shape: f32[5,1,128], index: 3, kind: input, shape index: {}]
  %s4 = inlined_call_operand.hbm [shape: f32[8,128], index: 4, kind: input, shape index: {}]
  %s5 = inlined_call_operand.hbm [shape: f32[4,128], index: 5, kind: output, shape index: {}]
  %s6 = sld [smem:[#allocation0]]
  $region50: #{tpu_custom_call.1} parent=0
    _
  %s8 = ssub.s32 1, %s6
  %s9 = scalar_select 0, %s8, %s6
  $region1: #{tpu_custom_call.1} parent=0
    #allocation2 [shape = 'u8[16384]{0}', space=vmem, size = 0x4000, scoped, tag = 'input window, operand 0, single buffered']
    #allocation3 [shape = 's32[1]{0}', space=sflag, size = 0x4, scoped, tag = 'scoped memory for tpu_custom_call.1']
    #allocation4 [shape = 's32[1]{0}', space=sflag, size = 0x4, scoped, tag = 'scoped memory for tpu_custom_call.1']
    #allocation5 [shape = 'u8[16384]{0}', space=vmem, size = 0x4000, scoped, tag = 'input window, operand 1, single buffered']
    #allocation6 [shape = 's32[1]{0}', space=sflag, size = 0x4, scoped, tag = 'scoped memory for tpu_custom_call.1']
    #allocation7 [shape = 'u8[983040]{0}', space=vmem, size = 0xf0000, scoped, tag = 'input window, operand 2, single buffered']
    #allocation8 [shape = 'u8[2560]{0}', space=vmem, size = 0xc00, scoped, tag = 'input window, operand 3, single buffered']
    #allocation9 [shape = 's32[1]{0}', space=sflag, size = 0x4, scoped, tag = 'scoped memory for tpu_custom_call.1']
    #allocation10 [shape = 'u8[4096]{0}', space=vmem, size = 0x1000, scoped, tag = 'input window, operand 4, single buffered']
    #allocation11 [shape = 'u8[2048]{0}', space=vmem, size = 0x800, scoped, tag = 'output window, operand 0, single buffered']
    %10 = vsyncpa [#allocation3], 0
    %11 = vsyncpa [#allocation6], 0
    %12 = vsyncpa [#allocation9], 0
    %13 = vsyncpa [#allocation4], 0
    // Predicated region
    $region2: #{tpu_custom_call.1} parent=1 // pred_check
      _
    $region3: #{tpu_custom_call.1} parent=1 // pred_check_branch
      %15 = sbr.rel (0) target = $region5
    $region4: #{tpu_custom_call.1} parent=1 // pred_region
      %17 = vsyncadd [#allocation3], 0
      %s18 = sshll.u32 %s0, 4
      %s19 = int_to_ptr.hbm [resolvable:$true] %s18
      %s20 = sshll.u32 [#allocation2], 4
      %s21 = int_to_ptr.vmem [resolvable:$true] %s20
      %26 = dma.hbm_to_vmem [thread:$0]  %s19, 512, %s21, [#allocation3], 128, 128, 8
    $region5: #{tpu_custom_call.1} parent=1 // pred_fallthru
      _
    // Predicated region
    $region6: #{tpu_custom_call.1} parent=1 // pred_check
      _
    $region7: #{tpu_custom_call.1} parent=1 // pred_check_branch
      %28 = sbr.rel (0) target = $region9
    $region8: #{tpu_custom_call.1} parent=1 // pred_region
      %30 = vsyncadd [#allocation6], 0
      %s31 = sshll.u32 %s1, 4
      %s32 = int_to_ptr.hbm [resolvable:$true] %s31
      %s33 = sshll.u32 [#allocation5], 4
      %s34 = int_to_ptr.vmem [resolvable:$true] %s33
      %39 = dma.hbm_to_vmem [thread:$0]  %s32, 512, %s34, [#allocation6], 128, 128, 8
    $region9: #{tpu_custom_call.1} parent=1 // pred_fallthru
      _
    // Predicated region
    $region10: #{tpu_custom_call.1} parent=1 // pred_check
      _
    $region11: #{tpu_custom_call.1} parent=1 // pred_check_branch
      %41 = sbr.rel (0) target = $region13
    $region12: #{tpu_custom_call.1} parent=1 // pred_region
      %43 = vsyncadd [#allocation6], 0
      %s44 = sshll.u32 %s2, 4
      %s45 = int_to_ptr.hbm [resolvable:$true] %s44
      %s46 = sshll.u32 [#allocation7], 4
      %s47 = int_to_ptr.vmem [resolvable:$true] %s46
      %52 = dma.hbm_to_vmem [thread:$0]  %s45, 30720, %s47, [#allocation6], 128, 128, 8
    $region13: #{tpu_custom_call.1} parent=1 // pred_fallthru
      _
    // Predicated region
    $region14: #{tpu_custom_call.1} parent=1 // pred_check
      _
    $region15: #{tpu_custom_call.1} parent=1 // pred_check_branch
      %54 = sbr.rel (0) target = $region17
    $region16: #{tpu_custom_call.1} parent=1 // pred_region
      %56 = vsyncadd [#allocation9], 0
      %s57 = sshll.u32 %s3, 4
      %s58 = int_to_ptr.hbm [resolvable:$true] %s57
      %s59 = sshll.u32 [#allocation8], 4
      %s60 = int_to_ptr.vmem [resolvable:$true] %s59
      %65 = dma.hbm_to_vmem [thread:$0]  %s58, 80, %s60, [#allocation9], 16, 16, 1
    $region17: #{tpu_custom_call.1} parent=1 // pred_fallthru
      _
    // Predicated region
    $region18: #{tpu_custom_call.1} parent=1 // pred_check
      _
    $region19: #{tpu_custom_call.1} parent=1 // pred_check_branch
      %67 = sbr.rel (0) target = $region21
    $region20: #{tpu_custom_call.1} parent=1 // pred_region
      %69 = vsyncadd [#allocation9], 0
      %s71 = sshll.u32 %s4, 4
      %s72 = int_to_ptr.hbm [resolvable:$true] %s71
      %s73 = sshll.u32 [#allocation10], 4
      %s74 = int_to_ptr.vmem [resolvable:$true] %s73
      %76 = dma.hbm_to_vmem [thread:$0]  %s72, 128, %s74, [#allocation9]
    $region21: #{tpu_custom_call.1} parent=1 // pred_fallthru
      _
    // Predicated region
    $region22: #{tpu_custom_call.1} parent=1 // pred_check
      _
    $region23: #{tpu_custom_call.1} parent=1 // pred_check_branch
      %78 = sbr.rel (0) target = $region25
    $region24: #{tpu_custom_call.1} parent=1 // pred_region
      %80 = dma.done [#allocation3], 512
    $region25: #{tpu_custom_call.1} parent=1 // pred_fallthru
      _
    // Predicated region
    $region26: #{tpu_custom_call.1} parent=1 // pred_check
      _
    $region27: #{tpu_custom_call.1} parent=1 // pred_check_branch
      %82 = sbr.rel (0) target = $region29
    $region28: #{tpu_custom_call.1} parent=1 // pred_region
      %84 = dma.done [#allocation6], 512
    $region29: #{tpu_custom_call.1} parent=1 // pred_fallthru
      _
    // Predicated region
    $region30: #{tpu_custom_call.1} parent=1 // pred_check
      _
    $region31: #{tpu_custom_call.1} parent=1 // pred_check_branch
      %86 = sbr.rel (0) target = $region33
    $region32: #{tpu_custom_call.1} parent=1 // pred_region
      %88 = dma.done [#allocation6], 30720
    $region33: #{tpu_custom_call.1} parent=1 // pred_fallthru
      _
    // Predicated region
    $region34: #{tpu_custom_call.1} parent=1 // pred_check
      _
    $region35: #{tpu_custom_call.1} parent=1 // pred_check_branch
      %90 = sbr.rel (0) target = $region37
    $region36: #{tpu_custom_call.1} parent=1 // pred_region
      %92 = dma.done [#allocation9], 80
    $region37: #{tpu_custom_call.1} parent=1 // pred_fallthru
      _
    // Predicated region
    $region38: #{tpu_custom_call.1} parent=1 // pred_check
      _
    $region39: #{tpu_custom_call.1} parent=1 // pred_check_branch
      %94 = sbr.rel (0) target = $region41
    $region40: #{tpu_custom_call.1} parent=1 // pred_region
      %96 = dma.done [#allocation9], 128
    $region41: #{tpu_custom_call.1} parent=1 // pred_fallthru
      _
    %v97 = vld [vmem:[#allocation2] sm:$0xff]
    %v98 = vld [vmem:[#allocation2 + $0x8] sm:$0xff]
    %v99 = vld [vmem:[#allocation2 + $0x10] sm:$0xff]
    %v100 = vld [vmem:[#allocation2 + $0x18] sm:$0xff]
    %v101 = vlaneseq
    %v102 = vshrl.u32 %v101, 7
    %v103 = vadd.s32 %v102, 8
    %v104 = vadd.s32 %v102, 16
    %v105 = vadd.s32 %v102, 24
    %v106 = vand.u32 %v102, 7
    %v107 = vand.u32 %v103, 7
    %v108 = vand.u32 %v104, 7
    %v109 = vand.u32 %v105, 7
    %vm110 = vcmp.gt.s32.totalorder %v106, 0
    %vm111 = vcmp.gt.s32.totalorder %v107, 0
    %vm112 = vcmp.gt.s32.totalorder %v108, 0
    %vm113 = vcmp.gt.s32.totalorder %v109, 0
    %v114 = vsel %vm110, 1.0, 0.0
    %v115 = vsel %vm111, 1.0, 0.0
    %v116 = vsel %vm112, 1.0, 0.0
    %v117 = vsel %vm113, 1.0, 0.0
    %vm118 = vcmp.lt.s32.totalorder %v106, 7
    %vm119 = vcmp.lt.s32.totalorder %v107, 7
    %vm120 = vcmp.lt.s32.totalorder %v108, 7
    %vm121 = vcmp.lt.s32.totalorder %v109, 7
    %v122 = vsel %vm118, 1.0, 0.0
    %v123 = vsel %vm119, 1.0, 0.0
    %v124 = vsel %vm120, 1.0, 0.0
    %v125 = vsel %vm121, 1.0, 0.0
    %v126 = vrot.slane %v97, 7
    %v127 = vrot.slane %v98, 7
    %v128 = vrot.slane %v99, 7
    %v129 = vrot.slane %v100, 7
    %vm130 = vcmp.lt.s32.totalorder %v102, 1
    %v131 = vsel %vm130, %v128, %v129
    %v132 = vsel %vm130, %v127, %v128
    %v133 = vsel %vm130, %v126, %v127
    %v134 = vsel %vm130, %v129, %v126
    %v135 = vmul.f32 %v134, %v114
    %v136 = vmul.f32 %v133, %v115
    %v137 = vmul.f32 %v132, %v116
    %v138 = vmul.f32 %v131, %v117
    %v139 = vrot.slane %v97, 1
    %v140 = vrot.slane %v98, 1
    %v141 = vrot.slane %v99, 1
    %v142 = vrot.slane %v100, 1
    %vm143 = vcmp.lt.s32.totalorder %v102, 7
    %v144 = vsel %vm143, %v141, %v142
    %v145 = vsel %vm143, %v140, %v141
    %v146 = vsel %vm143, %v139, %v140
    %v147 = vsel %vm143, %v142, %v139
    %v148 = vmul.f32 %v146, %v122
    %v149 = vmul.f32 %v145, %v123
    %v150 = vmul.f32 %v144, %v124
    %v151 = vmul.f32 %v147, %v125
    %v152 = vld [vmem:[#allocation7] sm:$0xff]
    %v153 = vld [vmem:[#allocation7 + $0x8] sm:$0xff]
    %v154 = vld [vmem:[#allocation7 + $0x10] sm:$0xff]
    %v155 = vld [vmem:[#allocation7 + $0x18] sm:$0xff]
    %v156 = vld [vmem:[#allocation7 + $0x20] sm:$0xff]
    %v157 = vld [vmem:[#allocation7 + $0x28] sm:$0xff]
    %v158 = vld [vmem:[#allocation7 + $0x30] sm:$0xff]
    %v159 = vld [vmem:[#allocation7 + $0x38] sm:$0xff]
    %v160 = vld [vmem:[#allocation7 + $0x40] sm:$0xff]
    %v161 = vld [vmem:[#allocation7 + $0x48] sm:$0xff]
    %v162 = vld [vmem:[#allocation7 + $0x50] sm:$0xff]
    %v163 = vld [vmem:[#allocation7 + $0x58] sm:$0xff]
    %v164 = vld [vmem:[#allocation7 + $0x60] sm:$0xff]
    %v165 = vld [vmem:[#allocation7 + $0x68] sm:$0xff]
    %v166 = vld [vmem:[#allocation7 + $0x70] sm:$0xff]
    %v167 = vld [vmem:[#allocation7 + $0x78] sm:$0xff]
    %s168 = scalar_lea.vmem [#allocation7], 128
    %v169 = vld [vmem:[%s168] sm:$0xff]
    %v170 = vld [vmem:[%s168 + $0x8] sm:$0xff]
    %v171 = vld [vmem:[%s168 + $0x10] sm:$0xff]
    %v172 = vld [vmem:[%s168 + $0x18] sm:$0xff]
    %v173 = vld [vmem:[%s168 + $0x20] sm:$0xff]
    %v174 = vld [vmem:[%s168 + $0x28] sm:$0xff]
    %v175 = vld [vmem:[%s168 + $0x30] sm:$0xff]
    %v176 = vld [vmem:[%s168 + $0x38] sm:$0xff]
    %v177 = vld [vmem:[%s168 + $0x40] sm:$0xff]
    %v178 = vld [vmem:[%s168 + $0x48] sm:$0xff]
    %v179 = vld [vmem:[%s168 + $0x50] sm:$0xff]
    %v180 = vld [vmem:[%s168 + $0x58] sm:$0xff]
    %v181 = vld [vmem:[%s168 + $0x60] sm:$0xff]
    %v182 = vld [vmem:[%s168 + $0x68] sm:$0xff]
    %v183 = vld [vmem:[%s168 + $0x70] sm:$0xff]
    %v184 = vld [vmem:[%s168 + $0x78] sm:$0xff]
    %185 = vmatpush.msra.mxu0 %v184
    %186 = vmatpush.msra.mxu0 %v183
    %187 = vmatpush.msra.mxu0 %v182
    %188 = vmatpush.msra.mxu0 %v181
    %189 = vmatpush.msra.mxu0 %v180
    %190 = vmatpush.msra.mxu0 %v179
    %191 = vmatpush.msra.mxu0 %v178
    %192 = vmatpush.msra.mxu0 %v177
    %193 = vmatpush.msra.mxu0 %v176
    %194 = vmatpush.msra.mxu0 %v175
    %195 = vmatpush.msra.mxu0 %v174
    %196 = vmatpush.msra.mxu0 %v173
    %197 = vmatpush.msra.mxu0 %v172
    %198 = vmatpush.msra.mxu0 %v171
    %199 = vmatpush.msra.mxu0 %v170
    %200 = vmatpush.msra.mxu0 %v169
    %201 = vmatmul.f32.gmra.mxu0 %v97
    %v202 = vpop.f32.mrf.mxu0
    %v203 = vadd.f32 0.0, %v202
    %204 = vmatmul.f32.gmra.mxu0 %v98
    %v205 = vpop.f32.mrf.mxu0
    %v206 = vadd.f32 0.0, %v205
    %207 = vmatmul.f32.gmra.mxu0 %v99
    %v208 = vpop.f32.mrf.mxu0
    %v209 = vadd.f32 0.0, %v208
    %210 = vmatmul.f32.gmra.mxu0 %v100
    %v211 = vpop.f32.mrf.mxu0
    %v212 = vadd.f32 0.0, %v211
    %213 = vdwg.mxu0
    %214 = vmatpush.msra.mxu0 %v167
    %215 = vmatpush.msra.mxu0 %v166
    %216 = vmatpush.msra.mxu0 %v165
    %217 = vmatpush.msra.mxu0 %v164
    %218 = vmatpush.msra.mxu0 %v163
    %219 = vmatpush.msra.mxu0 %v162
    %220 = vmatpush.msra.mxu0 %v161
    %221 = vmatpush.msra.mxu0 %v160
    %222 = vmatpush.msra.mxu0 %v159
    %223 = vmatpush.msra.mxu0 %v158
    %224 = vmatpush.msra.mxu0 %v157
    %225 = vmatpush.msra.mxu0 %v156
    %226 = vmatpush.msra.mxu0 %v155
    %227 = vmatpush.msra.mxu0 %v154
    %228 = vmatpush.msra.mxu0 %v153
    %229 = vmatpush.msra.mxu0 %v152
    %230 = vmatmul.f32.gmra.mxu0 %v135
    %v231 = vpop.f32.mrf.mxu0
    %v232 = vadd.f32 %v203, %v231
    %233 = vmatmul.f32.gmra.mxu0 %v136
    %v234 = vpop.f32.mrf.mxu0
    %v235 = vadd.f32 %v206, %v234
    %236 = vmatmul.f32.gmra.mxu0 %v137
    %v237 = vpop.f32.mrf.mxu0
    %v238 = vadd.f32 %v209, %v237
    %239 = vmatmul.f32.gmra.mxu0 %v138
    %v240 = vpop.f32.mrf.mxu0
    %v241 = vadd.f32 %v212, %v240
    %242 = vdwg.mxu0
    %s243 = scalar_lea.vmem [#allocation7], 256
    %v244 = vld [vmem:[%s243] sm:$0xff]
    %v245 = vld [vmem:[%s243 + $0x8] sm:$0xff]
    %v246 = vld [vmem:[%s243 + $0x10] sm:$0xff]
    %v247 = vld [vmem:[%s243 + $0x18] sm:$0xff]
    %v248 = vld [vmem:[%s243 + $0x20] sm:$0xff]
    %v249 = vld [vmem:[%s243 + $0x28] sm:$0xff]
    %v250 = vld [vmem:[%s243 + $0x30] sm:$0xff]
    %v251 = vld [vmem:[%s243 + $0x38] sm:$0xff]
    %v252 = vld [vmem:[%s243 + $0x40] sm:$0xff]
    %v253 = vld [vmem:[%s243 + $0x48] sm:$0xff]
    %v254 = vld [vmem:[%s243 + $0x50] sm:$0xff]
    %v255 = vld [vmem:[%s243 + $0x58] sm:$0xff]
    %v256 = vld [vmem:[%s243 + $0x60] sm:$0xff]
    %v257 = vld [vmem:[%s243 + $0x68] sm:$0xff]
    %v258 = vld [vmem:[%s243 + $0x70] sm:$0xff]
    %v259 = vld [vmem:[%s243 + $0x78] sm:$0xff]
    %260 = vmatpush.msra.mxu0 %v259
    %261 = vmatpush.msra.mxu0 %v258
    %262 = vmatpush.msra.mxu0 %v257
    %263 = vmatpush.msra.mxu0 %v256
    %264 = vmatpush.msra.mxu0 %v255
    %265 = vmatpush.msra.mxu0 %v254
    %266 = vmatpush.msra.mxu0 %v253
    %267 = vmatpush.msra.mxu0 %v252
    %268 = vmatpush.msra.mxu0 %v251
    %269 = vmatpush.msra.mxu0 %v250
    %270 = vmatpush.msra.mxu0 %v249
    %271 = vmatpush.msra.mxu0 %v248
    %272 = vmatpush.msra.mxu0 %v247
    %273 = vmatpush.msra.mxu0 %v246
    %274 = vmatpush.msra.mxu0 %v245
    %275 = vmatpush.msra.mxu0 %v244
    %276 = vmatmul.f32.gmra.mxu0 %v148
    %v277 = vpop.f32.mrf.mxu0
    %v278 = vadd.f32 0.0, %v277
    %279 = vmatmul.f32.gmra.mxu0 %v149
    %v280 = vpop.f32.mrf.mxu0
    %v281 = vadd.f32 0.0, %v280
    %282 = vmatmul.f32.gmra.mxu0 %v150
    %v283 = vpop.f32.mrf.mxu0
    %v284 = vadd.f32 0.0, %v283
    %285 = vmatmul.f32.gmra.mxu0 %v151
    %v286 = vpop.f32.mrf.mxu0
    %v287 = vadd.f32 0.0, %v286
    %288 = vdwg.mxu0
    %v289 = vadd.f32 %v232, %v278
    %v290 = vadd.f32 %v235, %v281
    %v291 = vadd.f32 %v238, %v284
    %v292 = vadd.f32 %v241, %v287
    %v293 = vld [vmem:[#allocation8] sm:$0x1]
    %v295 = vperm.slane %v293, 0
    %v297 = vadd.f32 %v289, %v295
    %v298 = vadd.f32 %v290, %v295
    %v299 = vadd.f32 %v291, %v295
    %v300 = vadd.f32 %v292, %v295
    %vm301 = vcmp.gt.f32.partialorder %v297, 0.0
    %vm302 = vcmp.gt.f32.partialorder %v298, 0.0
    %vm303 = vcmp.gt.f32.partialorder %v299, 0.0
    %vm304 = vcmp.gt.f32.partialorder %v300, 0.0
    %v305 = vmul.f32 %v297, 0.02
    %v306 = vmul.f32 %v298, 0.02
    %v307 = vmul.f32 %v299, 0.02
    %v308 = vmul.f32 %v300, 0.02
    %v309 = vsel %vm301, %v297, %v305
    %v310 = vsel %vm302, %v298, %v306
    %v311 = vsel %vm303, %v299, %v307
    %v312 = vsel %vm304, %v300, %v308
    %v313 = vrot.slane %v309, 7
    %v314 = vrot.slane %v310, 7
    %v315 = vrot.slane %v311, 7
    %v316 = vrot.slane %v312, 7
    %v317 = vsel %vm130, %v315, %v316
    %v318 = vsel %vm130, %v314, %v315
    %v319 = vsel %vm130, %v313, %v314
    %v320 = vsel %vm130, %v316, %v313
    %v321 = vmul.f32 %v320, %v114
    %v322 = vmul.f32 %v319, %v115
    %v323 = vmul.f32 %v318, %v116
    %v324 = vmul.f32 %v317, %v117
    %v325 = vrot.slane %v309, 1
    %v326 = vrot.slane %v310, 1
    %v327 = vrot.slane %v311, 1
    %v328 = vrot.slane %v312, 1
    %v329 = vsel %vm143, %v327, %v328
    %v330 = vsel %vm143, %v326, %v327
    %v331 = vsel %vm143, %v325, %v326
    %v332 = vsel %vm143, %v328, %v325
    %v333 = vmul.f32 %v331, %v122
    %v334 = vmul.f32 %v330, %v123
    %v335 = vmul.f32 %v329, %v124
    %v336 = vmul.f32 %v332, %v125
    %s337 = scalar_lea.vmem [#allocation7], 384
    %v338 = vld [vmem:[%s337] sm:$0xff]
    %v339 = vld [vmem:[%s337 + $0x8] sm:$0xff]
    %v340 = vld [vmem:[%s337 + $0x10] sm:$0xff]
    %v341 = vld [vmem:[%s337 + $0x18] sm:$0xff]
    %v342 = vld [vmem:[%s337 + $0x20] sm:$0xff]
    %v343 = vld [vmem:[%s337 + $0x28] sm:$0xff]
    %v344 = vld [vmem:[%s337 + $0x30] sm:$0xff]
    %v345 = vld [vmem:[%s337 + $0x38] sm:$0xff]
    %v346 = vld [vmem:[%s337 + $0x40] sm:$0xff]
    %v347 = vld [vmem:[%s337 + $0x48] sm:$0xff]
    %v348 = vld [vmem:[%s337 + $0x50] sm:$0xff]
    %v349 = vld [vmem:[%s337 + $0x58] sm:$0xff]
    %v350 = vld [vmem:[%s337 + $0x60] sm:$0xff]
    %v351 = vld [vmem:[%s337 + $0x68] sm:$0xff]
    %v352 = vld [vmem:[%s337 + $0x70] sm:$0xff]
    %v353 = vld [vmem:[%s337 + $0x78] sm:$0xff]
    %s354 = scalar_lea.vmem [#allocation7], 512
    %v355 = vld [vmem:[%s354] sm:$0xff]
    %v356 = vld [vmem:[%s354 + $0x8] sm:$0xff]
    %v357 = vld [vmem:[%s354 + $0x10] sm:$0xff]
    %v358 = vld [vmem:[%s354 + $0x18] sm:$0xff]
    %v359 = vld [vmem:[%s354 + $0x20] sm:$0xff]
    %v360 = vld [vmem:[%s354 + $0x28] sm:$0xff]
    %v361 = vld [vmem:[%s354 + $0x30] sm:$0xff]
    %v362 = vld [vmem:[%s354 + $0x38] sm:$0xff]
    %v363 = vld [vmem:[%s354 + $0x40] sm:$0xff]
    %v364 = vld [vmem:[%s354 + $0x48] sm:$0xff]
    %v365 = vld [vmem:[%s354 + $0x50] sm:$0xff]
    %v366 = vld [vmem:[%s354 + $0x58] sm:$0xff]
    %v367 = vld [vmem:[%s354 + $0x60] sm:$0xff]
    %v368 = vld [vmem:[%s354 + $0x68] sm:$0xff]
    %v369 = vld [vmem:[%s354 + $0x70] sm:$0xff]
    %v370 = vld [vmem:[%s354 + $0x78] sm:$0xff]
    %371 = vmatpush.msra.mxu0 %v370
    %372 = vmatpush.msra.mxu0 %v369
    %373 = vmatpush.msra.mxu0 %v368
    %374 = vmatpush.msra.mxu0 %v367
    %375 = vmatpush.msra.mxu0 %v366
    %376 = vmatpush.msra.mxu0 %v365
    %377 = vmatpush.msra.mxu0 %v364
    %378 = vmatpush.msra.mxu0 %v363
    %379 = vmatpush.msra.mxu0 %v362
    %380 = vmatpush.msra.mxu0 %v361
    %381 = vmatpush.msra.mxu0 %v360
    %382 = vmatpush.msra.mxu0 %v359
    %383 = vmatpush.msra.mxu0 %v358
    %384 = vmatpush.msra.mxu0 %v357
    %385 = vmatpush.msra.mxu0 %v356
    %386 = vmatpush.msra.mxu0 %v355
    %387 = vmatmul.f32.gmra.mxu0 %v309
    %v388 = vpop.f32.mrf.mxu0
    %v389 = vadd.f32 0.0, %v388
    %390 = vmatmul.f32.gmra.mxu0 %v310
    %v391 = vpop.f32.mrf.mxu0
    %v392 = vadd.f32 0.0, %v391
    %393 = vmatmul.f32.gmra.mxu0 %v311
    %v394 = vpop.f32.mrf.mxu0
    %v395 = vadd.f32 0.0, %v394
    %396 = vmatmul.f32.gmra.mxu0 %v312
    %v397 = vpop.f32.mrf.mxu0
    %v398 = vadd.f32 0.0, %v397
    %399 = vdwg.mxu0
    %400 = vmatpush.msra.mxu0 %v353
    %401 = vmatpush.msra.mxu0 %v352
    %402 = vmatpush.msra.mxu0 %v351
    %403 = vmatpush.msra.mxu0 %v350
    %404 = vmatpush.msra.mxu0 %v349
    %405 = vmatpush.msra.mxu0 %v348
    %406 = vmatpush.msra.mxu0 %v347
    %407 = vmatpush.msra.mxu0 %v346
    %408 = vmatpush.msra.mxu0 %v345
    %409 = vmatpush.msra.mxu0 %v344
    %410 = vmatpush.msra.mxu0 %v343
    %411 = vmatpush.msra.mxu0 %v342
    %412 = vmatpush.msra.mxu0 %v341
    %413 = vmatpush.msra.mxu0 %v340
    %414 = vmatpush.msra.mxu0 %v339
    %415 = vmatpush.msra.mxu0 %v338
    %416 = vmatmul.f32.gmra.mxu0 %v321
    %v417 = vpop.f32.mrf.mxu0
    %v418 = vadd.f32 %v389, %v417
    %419 = vmatmul.f32.gmra.mxu0 %v322
    %v420 = vpop.f32.mrf.mxu0
    %v421 = vadd.f32 %v392, %v420
    %422 = vmatmul.f32.gmra.mxu0 %v323
    %v423 = vpop.f32.mrf.mxu0
    %v424 = vadd.f32 %v395, %v423
    %425 = vmatmul.f32.gmra.mxu0 %v324
    %v426 = vpop.f32.mrf.mxu0
    %v427 = vadd.f32 %v398, %v426
    %428 = vdwg.mxu0
    %s429 = scalar_lea.vmem [#allocation7], 640
    %v430 = vld [vmem:[%s429] sm:$0xff]
    %v431 = vld [vmem:[%s429 + $0x8] sm:$0xff]
    %v432 = vld [vmem:[%s429 + $0x10] sm:$0xff]
    %v433 = vld [vmem:[%s429 + $0x18] sm:$0xff]
    %v434 = vld [vmem:[%s429 + $0x20] sm:$0xff]
    %v435 = vld [vmem:[%s429 + $0x28] sm:$0xff]
    %v436 = vld [vmem:[%s429 + $0x30] sm:$0xff]
    %v437 = vld [vmem:[%s429 + $0x38] sm:$0xff]
    %v438 = vld [vmem:[%s429 + $0x40] sm:$0xff]
    %v439 = vld [vmem:[%s429 + $0x48] sm:$0xff]
    %v440 = vld [vmem:[%s429 + $0x50] sm:$0xff]
    %v441 = vld [vmem:[%s429 + $0x58] sm:$0xff]
    %v442 = vld [vmem:[%s429 + $0x60] sm:$0xff]
    %v443 = vld [vmem:[%s429 + $0x68] sm:$0xff]
    %v444 = vld [vmem:[%s429 + $0x70] sm:$0xff]
    %v445 = vld [vmem:[%s429 + $0x78] sm:$0xff]
    %446 = vmatpush.msra.mxu0 %v445
    %447 = vmatpush.msra.mxu0 %v444
    %448 = vmatpush.msra.mxu0 %v443
    %449 = vmatpush.msra.mxu0 %v442
    %450 = vmatpush.msra.mxu0 %v441
    %451 = vmatpush.msra.mxu0 %v440
    %452 = vmatpush.msra.mxu0 %v439
    %453 = vmatpush.msra.mxu0 %v438
    %454 = vmatpush.msra.mxu0 %v437
    %455 = vmatpush.msra.mxu0 %v436
    %456 = vmatpush.msra.mxu0 %v435
    %457 = vmatpush.msra.mxu0 %v434
    %458 = vmatpush.msra.mxu0 %v433
    %459 = vmatpush.msra.mxu0 %v432
    %460 = vmatpush.msra.mxu0 %v431
    %461 = vmatpush.msra.mxu0 %v430
    %462 = vmatmul.f32.gmra.mxu0 %v333
    %v463 = vpop.f32.mrf.mxu0
    %v464 = vadd.f32 0.0, %v463
    %465 = vmatmul.f32.gmra.mxu0 %v334
    %v466 = vpop.f32.mrf.mxu0
    %v467 = vadd.f32 0.0, %v466
    %468 = vmatmul.f32.gmra.mxu0 %v335
    %v469 = vpop.f32.mrf.mxu0
    %v470 = vadd.f32 0.0, %v469
    %471 = vmatmul.f32.gmra.mxu0 %v336
    %v472 = vpop.f32.mrf.mxu0
    %v473 = vadd.f32 0.0, %v472
    %474 = vdwg.mxu0
    %v475 = vadd.f32 %v418, %v464
    %v476 = vadd.f32 %v421, %v467
    %v477 = vadd.f32 %v424, %v470
    %v478 = vadd.f32 %v427, %v473
    %s479 = scalar_lea.vmem [#allocation8], 1
    %v480 = vld [vmem:[%s479] sm:$0x1]
    %v482 = vperm.slane %v480, 0
    %v484 = vadd.f32 %v475, %v482
    %v485 = vadd.f32 %v476, %v482
    %v486 = vadd.f32 %v477, %v482
    %v487 = vadd.f32 %v478, %v482
    %vm488 = vcmp.gt.f32.partialorder %v484, 0.0
    %vm489 = vcmp.gt.f32.partialorder %v485, 0.0
    %vm490 = vcmp.gt.f32.partialorder %v486, 0.0
    %vm491 = vcmp.gt.f32.partialorder %v487, 0.0
    %v492 = vmul.f32 %v484, 0.02
    %v493 = vmul.f32 %v485, 0.02
    %v494 = vmul.f32 %v486, 0.02
    %v495 = vmul.f32 %v487, 0.02
    %v496 = vsel %vm488, %v484, %v492
    %v497 = vsel %vm489, %v485, %v493
    %v498 = vsel %vm490, %v486, %v494
    %v499 = vsel %vm491, %v487, %v495
    %v500 = vrot.slane %v496, 7
    %v501 = vrot.slane %v497, 7
    %v502 = vrot.slane %v498, 7
    %v503 = vrot.slane %v499, 7
    %v504 = vsel %vm130, %v502, %v503
    %v505 = vsel %vm130, %v501, %v502
    %v506 = vsel %vm130, %v500, %v501
    %v507 = vsel %vm130, %v503, %v500
    %v508 = vmul.f32 %v507, %v114
    %v509 = vmul.f32 %v506, %v115
    %v510 = vmul.f32 %v505, %v116
    %v511 = vmul.f32 %v504, %v117
    %v512 = vrot.slane %v496, 1
    %v513 = vrot.slane %v497, 1
    %v514 = vrot.slane %v498, 1
    %v515 = vrot.slane %v499, 1
    %v516 = vsel %vm143, %v514, %v515
    %v517 = vsel %vm143, %v513, %v514
    %v518 = vsel %vm143, %v512, %v513
    %v519 = vsel %vm143, %v515, %v512
    %v520 = vmul.f32 %v518, %v122
    %v521 = vmul.f32 %v517, %v123
    %v522 = vmul.f32 %v516, %v124
    %v523 = vmul.f32 %v519, %v125
    %s524 = scalar_lea.vmem [#allocation7], 768
    %v525 = vld [vmem:[%s524] sm:$0xff]
    %v526 = vld [vmem:[%s524 + $0x8] sm:$0xff]
    %v527 = vld [vmem:[%s524 + $0x10] sm:$0xff]
    %v528 = vld [vmem:[%s524 + $0x18] sm:$0xff]
    %v529 = vld [vmem:[%s524 + $0x20] sm:$0xff]
    %v530 = vld [vmem:[%s524 + $0x28] sm:$0xff]
    %v531 = vld [vmem:[%s524 + $0x30] sm:$0xff]
    %v532 = vld [vmem:[%s524 + $0x38] sm:$0xff]
    %v533 = vld [vmem:[%s524 + $0x40] sm:$0xff]
    %v534 = vld [vmem:[%s524 + $0x48] sm:$0xff]
    %v535 = vld [vmem:[%s524 + $0x50] sm:$0xff]
    %v536 = vld [vmem:[%s524 + $0x58] sm:$0xff]
    %v537 = vld [vmem:[%s524 + $0x60] sm:$0xff]
    %v538 = vld [vmem:[%s524 + $0x68] sm:$0xff]
    %v539 = vld [vmem:[%s524 + $0x70] sm:$0xff]
    %v540 = vld [vmem:[%s524 + $0x78] sm:$0xff]
    %s541 = scalar_lea.vmem [#allocation7], 896
    %v542 = vld [vmem:[%s541] sm:$0xff]
    %v543 = vld [vmem:[%s541 + $0x8] sm:$0xff]
    %v544 = vld [vmem:[%s541 + $0x10] sm:$0xff]
    %v545 = vld [vmem:[%s541 + $0x18] sm:$0xff]
    %v546 = vld [vmem:[%s541 + $0x20] sm:$0xff]
    %v547 = vld [vmem:[%s541 + $0x28] sm:$0xff]
    %v548 = vld [vmem:[%s541 + $0x30] sm:$0xff]
    %v549 = vld [vmem:[%s541 + $0x38] sm:$0xff]
    %v550 = vld [vmem:[%s541 + $0x40] sm:$0xff]
    %v551 = vld [vmem:[%s541 + $0x48] sm:$0xff]
    %v552 = vld [vmem:[%s541 + $0x50] sm:$0xff]
    %v553 = vld [vmem:[%s541 + $0x58] sm:$0xff]
    %v554 = vld [vmem:[%s541 + $0x60] sm:$0xff]
    %v555 = vld [vmem:[%s541 + $0x68] sm:$0xff]
    %v556 = vld [vmem:[%s541 + $0x70] sm:$0xff]
    %v557 = vld [vmem:[%s541 + $0x78] sm:$0xff]
    %558 = vmatpush.msra.mxu0 %v557
    %559 = vmatpush.msra.mxu0 %v556
    %560 = vmatpush.msra.mxu0 %v555
    %561 = vmatpush.msra.mxu0 %v554
    %562 = vmatpush.msra.mxu0 %v553
    %563 = vmatpush.msra.mxu0 %v552
    %564 = vmatpush.msra.mxu0 %v551
    %565 = vmatpush.msra.mxu0 %v550
    %566 = vmatpush.msra.mxu0 %v549
    %567 = vmatpush.msra.mxu0 %v548
    %568 = vmatpush.msra.mxu0 %v547
    %569 = vmatpush.msra.mxu0 %v546
    %570 = vmatpush.msra.mxu0 %v545
    %571 = vmatpush.msra.mxu0 %v544
    %572 = vmatpush.msra.mxu0 %v543
    %573 = vmatpush.msra.mxu0 %v542
    %574 = vmatmul.f32.gmra.mxu0 %v496
    %v575 = vpop.f32.mrf.mxu0
    %v576 = vadd.f32 0.0, %v575
    %577 = vmatmul.f32.gmra.mxu0 %v497
    %v578 = vpop.f32.mrf.mxu0
    %v579 = vadd.f32 0.0, %v578
    %580 = vmatmul.f32.gmra.mxu0 %v498
    %v581 = vpop.f32.mrf.mxu0
    %v582 = vadd.f32 0.0, %v581
    %583 = vmatmul.f32.gmra.mxu0 %v499
    %v584 = vpop.f32.mrf.mxu0
    %v585 = vadd.f32 0.0, %v584
    %586 = vdwg.mxu0
    %587 = vmatpush.msra.mxu0 %v540
    %588 = vmatpush.msra.mxu0 %v539
    %589 = vmatpush.msra.mxu0 %v538
    %590 = vmatpush.msra.mxu0 %v537
    %591 = vmatpush.msra.mxu0 %v536
    %592 = vmatpush.msra.mxu0 %v535
    %593 = vmatpush.msra.mxu0 %v534
    %594 = vmatpush.msra.mxu0 %v533
    %595 = vmatpush.msra.mxu0 %v532
    %596 = vmatpush.msra.mxu0 %v531
    %597 = vmatpush.msra.mxu0 %v530
    %598 = vmatpush.msra.mxu0 %v529
    %599 = vmatpush.msra.mxu0 %v528
    %600 = vmatpush.msra.mxu0 %v527
    %601 = vmatpush.msra.mxu0 %v526
    %602 = vmatpush.msra.mxu0 %v525
    %603 = vmatmul.f32.gmra.mxu0 %v508
    %v604 = vpop.f32.mrf.mxu0
    %v605 = vadd.f32 %v576, %v604
    %606 = vmatmul.f32.gmra.mxu0 %v509
    %v607 = vpop.f32.mrf.mxu0
    %v608 = vadd.f32 %v579, %v607
    %609 = vmatmul.f32.gmra.mxu0 %v510
    %v610 = vpop.f32.mrf.mxu0
    %v611 = vadd.f32 %v582, %v610
    %612 = vmatmul.f32.gmra.mxu0 %v511
    %v613 = vpop.f32.mrf.mxu0
    %v614 = vadd.f32 %v585, %v613
    %615 = vdwg.mxu0
    %s616 = scalar_lea.vmem [#allocation7], 1024
    %v617 = vld [vmem:[%s616] sm:$0xff]
    %v618 = vld [vmem:[%s616 + $0x8] sm:$0xff]
    %v619 = vld [vmem:[%s616 + $0x10] sm:$0xff]
    %v620 = vld [vmem:[%s616 + $0x18] sm:$0xff]
    %v621 = vld [vmem:[%s616 + $0x20] sm:$0xff]
    %v622 = vld [vmem:[%s616 + $0x28] sm:$0xff]
    %v623 = vld [vmem:[%s616 + $0x30] sm:$0xff]
    %v624 = vld [vmem:[%s616 + $0x38] sm:$0xff]
    %v625 = vld [vmem:[%s616 + $0x40] sm:$0xff]
    %v626 = vld [vmem:[%s616 + $0x48] sm:$0xff]
    %v627 = vld [vmem:[%s616 + $0x50] sm:$0xff]
    %v628 = vld [vmem:[%s616 + $0x58] sm:$0xff]
    %v629 = vld [vmem:[%s616 + $0x60] sm:$0xff]
    %v630 = vld [vmem:[%s616 + $0x68] sm:$0xff]
    %v631 = vld [vmem:[%s616 + $0x70] sm:$0xff]
    %v632 = vld [vmem:[%s616 + $0x78] sm:$0xff]
    %633 = vmatpush.msra.mxu0 %v632
    %634 = vmatpush.msra.mxu0 %v631
    %635 = vmatpush.msra.mxu0 %v630
    %636 = vmatpush.msra.mxu0 %v629
    %637 = vmatpush.msra.mxu0 %v628
    %638 = vmatpush.msra.mxu0 %v627
    %639 = vmatpush.msra.mxu0 %v626
    %640 = vmatpush.msra.mxu0 %v625
    %641 = vmatpush.msra.mxu0 %v624
    %642 = vmatpush.msra.mxu0 %v623
    %643 = vmatpush.msra.mxu0 %v622
    %644 = vmatpush.msra.mxu0 %v621
    %645 = vmatpush.msra.mxu0 %v620
    %646 = vmatpush.msra.mxu0 %v619
    %647 = vmatpush.msra.mxu0 %v618
    %648 = vmatpush.msra.mxu0 %v617
    %649 = vmatmul.f32.gmra.mxu0 %v520
    %v650 = vpop.f32.mrf.mxu0
    %v651 = vadd.f32 0.0, %v650
    %652 = vmatmul.f32.gmra.mxu0 %v521
    %v653 = vpop.f32.mrf.mxu0
    %v654 = vadd.f32 0.0, %v653
    %655 = vmatmul.f32.gmra.mxu0 %v522
    %v656 = vpop.f32.mrf.mxu0
    %v657 = vadd.f32 0.0, %v656
    %658 = vmatmul.f32.gmra.mxu0 %v523
    %v659 = vpop.f32.mrf.mxu0
    %v660 = vadd.f32 0.0, %v659
    %661 = vdwg.mxu0
    %v662 = vadd.f32 %v605, %v651
    %v663 = vadd.f32 %v608, %v654
    %v664 = vadd.f32 %v611, %v657
    %v665 = vadd.f32 %v614, %v660
    %s666 = scalar_lea.vmem [#allocation8], 2
    %v667 = vld [vmem:[%s666] sm:$0x1]
    %v669 = vperm.slane %v667, 0
    %v671 = vadd.f32 %v662, %v669
    %v672 = vadd.f32 %v663, %v669
    %v673 = vadd.f32 %v664, %v669
    %v674 = vadd.f32 %v665, %v669
    %vm675 = vcmp.gt.f32.partialorder %v671, 0.0
    %vm676 = vcmp.gt.f32.partialorder %v672, 0.0
    %vm677 = vcmp.gt.f32.partialorder %v673, 0.0
    %vm678 = vcmp.gt.f32.partialorder %v674, 0.0
    %v679 = vmul.f32 %v671, 0.02
    %v680 = vmul.f32 %v672, 0.02
    %v681 = vmul.f32 %v673, 0.02
    %v682 = vmul.f32 %v674, 0.02
    %v683 = vsel %vm675, %v671, %v679
    %v684 = vsel %vm676, %v672, %v680
    %v685 = vsel %vm677, %v673, %v681
    %v686 = vsel %vm678, %v674, %v682
    %v687 = vrot.slane %v683, 7
    %v688 = vrot.slane %v684, 7
    %v689 = vrot.slane %v685, 7
    %v690 = vrot.slane %v686, 7
    %v691 = vsel %vm130, %v689, %v690
    %v692 = vsel %vm130, %v688, %v689
    %v693 = vsel %vm130, %v687, %v688
    %v694 = vsel %vm130, %v690, %v687
    %v695 = vmul.f32 %v694, %v114
    %v696 = vmul.f32 %v693, %v115
    %v697 = vmul.f32 %v692, %v116
    %v698 = vmul.f32 %v691, %v117
    %v699 = vrot.slane %v683, 1
    %v700 = vrot.slane %v684, 1
    %v701 = vrot.slane %v685, 1
    %v702 = vrot.slane %v686, 1
    %v703 = vsel %vm143, %v701, %v702
    %v704 = vsel %vm143, %v700, %v701
    %v705 = vsel %vm143, %v699, %v700
    %v706 = vsel %vm143, %v702, %v699
    %v707 = vmul.f32 %v705, %v122
    %v708 = vmul.f32 %v704, %v123
    %v709 = vmul.f32 %v703, %v124
    %v710 = vmul.f32 %v706, %v125
    %s711 = scalar_lea.vmem [#allocation7], 1152
    %v712 = vld [vmem:[%s711] sm:$0xff]
    %v713 = vld [vmem:[%s711 + $0x8] sm:$0xff]
    %v714 = vld [vmem:[%s711 + $0x10] sm:$0xff]
    %v715 = vld [vmem:[%s711 + $0x18] sm:$0xff]
    %v716 = vld [vmem:[%s711 + $0x20] sm:$0xff]
    %v717 = vld [vmem:[%s711 + $0x28] sm:$0xff]
    %v718 = vld [vmem:[%s711 + $0x30] sm:$0xff]
    %v719 = vld [vmem:[%s711 + $0x38] sm:$0xff]
    %v720 = vld [vmem:[%s711 + $0x40] sm:$0xff]
    %v721 = vld [vmem:[%s711 + $0x48] sm:$0xff]
    %v722 = vld [vmem:[%s711 + $0x50] sm:$0xff]
    %v723 = vld [vmem:[%s711 + $0x58] sm:$0xff]
    %v724 = vld [vmem:[%s711 + $0x60] sm:$0xff]
    %v725 = vld [vmem:[%s711 + $0x68] sm:$0xff]
    %v726 = vld [vmem:[%s711 + $0x70] sm:$0xff]
    %v727 = vld [vmem:[%s711 + $0x78] sm:$0xff]
    %s728 = scalar_lea.vmem [#allocation7], 1280
    %v729 = vld [vmem:[%s728] sm:$0xff]
    %v730 = vld [vmem:[%s728 + $0x8] sm:$0xff]
    %v731 = vld [vmem:[%s728 + $0x10] sm:$0xff]
    %v732 = vld [vmem:[%s728 + $0x18] sm:$0xff]
    %v733 = vld [vmem:[%s728 + $0x20] sm:$0xff]
    %v734 = vld [vmem:[%s728 + $0x28] sm:$0xff]
    %v735 = vld [vmem:[%s728 + $0x30] sm:$0xff]
    %v736 = vld [vmem:[%s728 + $0x38] sm:$0xff]
    %v737 = vld [vmem:[%s728 + $0x40] sm:$0xff]
    %v738 = vld [vmem:[%s728 + $0x48] sm:$0xff]
    %v739 = vld [vmem:[%s728 + $0x50] sm:$0xff]
    %v740 = vld [vmem:[%s728 + $0x58] sm:$0xff]
    %v741 = vld [vmem:[%s728 + $0x60] sm:$0xff]
    %v742 = vld [vmem:[%s728 + $0x68] sm:$0xff]
    %v743 = vld [vmem:[%s728 + $0x70] sm:$0xff]
    %v744 = vld [vmem:[%s728 + $0x78] sm:$0xff]
    %745 = vmatpush.msra.mxu0 %v744
    %746 = vmatpush.msra.mxu0 %v743
    %747 = vmatpush.msra.mxu0 %v742
    %748 = vmatpush.msra.mxu0 %v741
    %749 = vmatpush.msra.mxu0 %v740
    %750 = vmatpush.msra.mxu0 %v739
    %751 = vmatpush.msra.mxu0 %v738
    %752 = vmatpush.msra.mxu0 %v737
    %753 = vmatpush.msra.mxu0 %v736
    %754 = vmatpush.msra.mxu0 %v735
    %755 = vmatpush.msra.mxu0 %v734
    %756 = vmatpush.msra.mxu0 %v733
    %757 = vmatpush.msra.mxu0 %v732
    %758 = vmatpush.msra.mxu0 %v731
    %759 = vmatpush.msra.mxu0 %v730
    %760 = vmatpush.msra.mxu0 %v729
    %761 = vmatmul.f32.gmra.mxu0 %v683
    %v762 = vpop.f32.mrf.mxu0
    %v763 = vadd.f32 0.0, %v762
    %764 = vmatmul.f32.gmra.mxu0 %v684
    %v765 = vpop.f32.mrf.mxu0
    %v766 = vadd.f32 0.0, %v765
    %767 = vmatmul.f32.gmra.mxu0 %v685
    %v768 = vpop.f32.mrf.mxu0
    %v769 = vadd.f32 0.0, %v768
    %770 = vmatmul.f32.gmra.mxu0 %v686
    %v771 = vpop.f32.mrf.mxu0
    %v772 = vadd.f32 0.0, %v771
    %773 = vdwg.mxu0
    %774 = vmatpush.msra.mxu0 %v727
    %775 = vmatpush.msra.mxu0 %v726
    %776 = vmatpush.msra.mxu0 %v725
    %777 = vmatpush.msra.mxu0 %v724
    %778 = vmatpush.msra.mxu0 %v723
    %779 = vmatpush.msra.mxu0 %v722
    %780 = vmatpush.msra.mxu0 %v721
    %781 = vmatpush.msra.mxu0 %v720
    %782 = vmatpush.msra.mxu0 %v719
    %783 = vmatpush.msra.mxu0 %v718
    %784 = vmatpush.msra.mxu0 %v717
    %785 = vmatpush.msra.mxu0 %v716
    %786 = vmatpush.msra.mxu0 %v715
    %787 = vmatpush.msra.mxu0 %v714
    %788 = vmatpush.msra.mxu0 %v713
    %789 = vmatpush.msra.mxu0 %v712
    %790 = vmatmul.f32.gmra.mxu0 %v695
    %v791 = vpop.f32.mrf.mxu0
    %v792 = vadd.f32 %v763, %v791
    %793 = vmatmul.f32.gmra.mxu0 %v696
    %v794 = vpop.f32.mrf.mxu0
    %v795 = vadd.f32 %v766, %v794
    %796 = vmatmul.f32.gmra.mxu0 %v697
    %v797 = vpop.f32.mrf.mxu0
    %v798 = vadd.f32 %v769, %v797
    %799 = vmatmul.f32.gmra.mxu0 %v698
    %v800 = vpop.f32.mrf.mxu0
    %v801 = vadd.f32 %v772, %v800
    %802 = vdwg.mxu0
    %s803 = scalar_lea.vmem [#allocation7], 1408
    %v804 = vld [vmem:[%s803] sm:$0xff]
    %v805 = vld [vmem:[%s803 + $0x8] sm:$0xff]
    %v806 = vld [vmem:[%s803 + $0x10] sm:$0xff]
    %v807 = vld [vmem:[%s803 + $0x18] sm:$0xff]
    %v808 = vld [vmem:[%s803 + $0x20] sm:$0xff]
    %v809 = vld [vmem:[%s803 + $0x28] sm:$0xff]
    %v810 = vld [vmem:[%s803 + $0x30] sm:$0xff]
    %v811 = vld [vmem:[%s803 + $0x38] sm:$0xff]
    %v812 = vld [vmem:[%s803 + $0x40] sm:$0xff]
    %v813 = vld [vmem:[%s803 + $0x48] sm:$0xff]
    %v814 = vld [vmem:[%s803 + $0x50] sm:$0xff]
    %v815 = vld [vmem:[%s803 + $0x58] sm:$0xff]
    %v816 = vld [vmem:[%s803 + $0x60] sm:$0xff]
    %v817 = vld [vmem:[%s803 + $0x68] sm:$0xff]
    %v818 = vld [vmem:[%s803 + $0x70] sm:$0xff]
    %v819 = vld [vmem:[%s803 + $0x78] sm:$0xff]
    %820 = vmatpush.msra.mxu0 %v819
    %821 = vmatpush.msra.mxu0 %v818
    %822 = vmatpush.msra.mxu0 %v817
    %823 = vmatpush.msra.mxu0 %v816
    %824 = vmatpush.msra.mxu0 %v815
    %825 = vmatpush.msra.mxu0 %v814
    %826 = vmatpush.msra.mxu0 %v813
    %827 = vmatpush.msra.mxu0 %v812
    %828 = vmatpush.msra.mxu0 %v811
    %829 = vmatpush.msra.mxu0 %v810
    %830 = vmatpush.msra.mxu0 %v809
    %831 = vmatpush.msra.mxu0 %v808
    %832 = vmatpush.msra.mxu0 %v807
    %833 = vmatpush.msra.mxu0 %v806
    %834 = vmatpush.msra.mxu0 %v805
    %835 = vmatpush.msra.mxu0 %v804
    %836 = vmatmul.f32.gmra.mxu0 %v707
    %v837 = vpop.f32.mrf.mxu0
    %v838 = vadd.f32 0.0, %v837
    %839 = vmatmul.f32.gmra.mxu0 %v708
    %v840 = vpop.f32.mrf.mxu0
    %v841 = vadd.f32 0.0, %v840
    %842 = vmatmul.f32.gmra.mxu0 %v709
    %v843 = vpop.f32.mrf.mxu0
    %v844 = vadd.f32 0.0, %v843
    %845 = vmatmul.f32.gmra.mxu0 %v710
    %v846 = vpop.f32.mrf.mxu0
    %v847 = vadd.f32 0.0, %v846
    %848 = vdwg.mxu0
    %v849 = vadd.f32 %v792, %v838
    %v850 = vadd.f32 %v795, %v841
    %v851 = vadd.f32 %v798, %v844
    %v852 = vadd.f32 %v801, %v847
    %s853 = scalar_lea.vmem [#allocation8], 3
    %v854 = vld [vmem:[%s853] sm:$0x1]
    %v856 = vperm.slane %v854, 0
    %v858 = vadd.f32 %v849, %v856
    %v859 = vadd.f32 %v850, %v856
    %v860 = vadd.f32 %v851, %v856
    %v861 = vadd.f32 %v852, %v856
    %vm862 = vcmp.gt.f32.partialorder %v858, 0.0
    %vm863 = vcmp.gt.f32.partialorder %v859, 0.0
    %vm864 = vcmp.gt.f32.partialorder %v860, 0.0
    %vm865 = vcmp.gt.f32.partialorder %v861, 0.0
    %v866 = vmul.f32 %v858, 0.02
    %v867 = vmul.f32 %v859, 0.02
    %v868 = vmul.f32 %v860, 0.02
    %v869 = vmul.f32 %v861, 0.02
    %v870 = vsel %vm862, %v858, %v866
    %v871 = vsel %vm863, %v859, %v867
    %v872 = vsel %vm864, %v860, %v868
    %v873 = vsel %vm865, %v861, %v869
    %v874 = vrot.slane %v870, 7
    %v875 = vrot.slane %v871, 7
    %v876 = vrot.slane %v872, 7
    %v877 = vrot.slane %v873, 7
    %v878 = vsel %vm130, %v876, %v877
    %v879 = vsel %vm130, %v875, %v876
    %v880 = vsel %vm130, %v874, %v875
    %v881 = vsel %vm130, %v877, %v874
    %v882 = vmul.f32 %v881, %v114
    %v883 = vmul.f32 %v880, %v115
    %v884 = vmul.f32 %v879, %v116
    %v885 = vmul.f32 %v878, %v117
    %v886 = vrot.slane %v870, 1
    %v887 = vrot.slane %v871, 1
    %v888 = vrot.slane %v872, 1
    %v889 = vrot.slane %v873, 1
    %v890 = vsel %vm143, %v888, %v889
    %v891 = vsel %vm143, %v887, %v888
    %v892 = vsel %vm143, %v886, %v887
    %v893 = vsel %vm143, %v889, %v886
    %v894 = vmul.f32 %v892, %v122
    %v895 = vmul.f32 %v891, %v123
    %v896 = vmul.f32 %v890, %v124
    %v897 = vmul.f32 %v893, %v125
    %s898 = scalar_lea.vmem [#allocation7], 1536
    %v899 = vld [vmem:[%s898] sm:$0xff]
    %v900 = vld [vmem:[%s898 + $0x8] sm:$0xff]
    %v901 = vld [vmem:[%s898 + $0x10] sm:$0xff]
    %v902 = vld [vmem:[%s898 + $0x18] sm:$0xff]
    %v903 = vld [vmem:[%s898 + $0x20] sm:$0xff]
    %v904 = vld [vmem:[%s898 + $0x28] sm:$0xff]
    %v905 = vld [vmem:[%s898 + $0x30] sm:$0xff]
    %v906 = vld [vmem:[%s898 + $0x38] sm:$0xff]
    %v907 = vld [vmem:[%s898 + $0x40] sm:$0xff]
    %v908 = vld [vmem:[%s898 + $0x48] sm:$0xff]
    %v909 = vld [vmem:[%s898 + $0x50] sm:$0xff]
    %v910 = vld [vmem:[%s898 + $0x58] sm:$0xff]
    %v911 = vld [vmem:[%s898 + $0x60] sm:$0xff]
    %v912 = vld [vmem:[%s898 + $0x68] sm:$0xff]
    %v913 = vld [vmem:[%s898 + $0x70] sm:$0xff]
    %v914 = vld [vmem:[%s898 + $0x78] sm:$0xff]
    %s915 = scalar_lea.vmem [#allocation7], 1664
    %v916 = vld [vmem:[%s915] sm:$0xff]
    %v917 = vld [vmem:[%s915 + $0x8] sm:$0xff]
    %v918 = vld [vmem:[%s915 + $0x10] sm:$0xff]
    %v919 = vld [vmem:[%s915 + $0x18] sm:$0xff]
    %v920 = vld [vmem:[%s915 + $0x20] sm:$0xff]
    %v921 = vld [vmem:[%s915 + $0x28] sm:$0xff]
    %v922 = vld [vmem:[%s915 + $0x30] sm:$0xff]
    %v923 = vld [vmem:[%s915 + $0x38] sm:$0xff]
    %v924 = vld [vmem:[%s915 + $0x40] sm:$0xff]
    %v925 = vld [vmem:[%s915 + $0x48] sm:$0xff]
    %v926 = vld [vmem:[%s915 + $0x50] sm:$0xff]
    %v927 = vld [vmem:[%s915 + $0x58] sm:$0xff]
    %v928 = vld [vmem:[%s915 + $0x60] sm:$0xff]
    %v929 = vld [vmem:[%s915 + $0x68] sm:$0xff]
    %v930 = vld [vmem:[%s915 + $0x70] sm:$0xff]
    %v931 = vld [vmem:[%s915 + $0x78] sm:$0xff]
    %932 = vmatpush.msra.mxu0 %v931
    %933 = vmatpush.msra.mxu0 %v930
    %934 = vmatpush.msra.mxu0 %v929
    %935 = vmatpush.msra.mxu0 %v928
    %936 = vmatpush.msra.mxu0 %v927
    %937 = vmatpush.msra.mxu0 %v926
    %938 = vmatpush.msra.mxu0 %v925
    %939 = vmatpush.msra.mxu0 %v924
    %940 = vmatpush.msra.mxu0 %v923
    %941 = vmatpush.msra.mxu0 %v922
    %942 = vmatpush.msra.mxu0 %v921
    %943 = vmatpush.msra.mxu0 %v920
    %944 = vmatpush.msra.mxu0 %v919
    %945 = vmatpush.msra.mxu0 %v918
    %946 = vmatpush.msra.mxu0 %v917
    %947 = vmatpush.msra.mxu0 %v916
    %948 = vmatmul.f32.gmra.mxu0 %v870
    %v949 = vpop.f32.mrf.mxu0
    %v950 = vadd.f32 0.0, %v949
    %951 = vmatmul.f32.gmra.mxu0 %v871
    %v952 = vpop.f32.mrf.mxu0
    %v953 = vadd.f32 0.0, %v952
    %954 = vmatmul.f32.gmra.mxu0 %v872
    %v955 = vpop.f32.mrf.mxu0
    %v956 = vadd.f32 0.0, %v955
    %957 = vmatmul.f32.gmra.mxu0 %v873
    %v958 = vpop.f32.mrf.mxu0
    %v959 = vadd.f32 0.0, %v958
    %960 = vdwg.mxu0
    %961 = vmatpush.msra.mxu0 %v914
    %962 = vmatpush.msra.mxu0 %v913
    %963 = vmatpush.msra.mxu0 %v912
    %964 = vmatpush.msra.mxu0 %v911
    %965 = vmatpush.msra.mxu0 %v910
    %966 = vmatpush.msra.mxu0 %v909
    %967 = vmatpush.msra.mxu0 %v908
    %968 = vmatpush.msra.mxu0 %v907
    %969 = vmatpush.msra.mxu0 %v906
    %970 = vmatpush.msra.mxu0 %v905
    %971 = vmatpush.msra.mxu0 %v904
    %972 = vmatpush.msra.mxu0 %v903
    %973 = vmatpush.msra.mxu0 %v902
    %974 = vmatpush.msra.mxu0 %v901
    %975 = vmatpush.msra.mxu0 %v900
    %976 = vmatpush.msra.mxu0 %v899
    %977 = vmatmul.f32.gmra.mxu0 %v882
    %v978 = vpop.f32.mrf.mxu0
    %v979 = vadd.f32 %v950, %v978
    %980 = vmatmul.f32.gmra.mxu0 %v883
    %v981 = vpop.f32.mrf.mxu0
    %v982 = vadd.f32 %v953, %v981
    %983 = vmatmul.f32.gmra.mxu0 %v884
    %v984 = vpop.f32.mrf.mxu0
    %v985 = vadd.f32 %v956, %v984
    %986 = vmatmul.f32.gmra.mxu0 %v885
    %v987 = vpop.f32.mrf.mxu0
    %v988 = vadd.f32 %v959, %v987
    %989 = vdwg.mxu0
    %s990 = scalar_lea.vmem [#allocation7], 1792
    %v991 = vld [vmem:[%s990] sm:$0xff]
    %v992 = vld [vmem:[%s990 + $0x8] sm:$0xff]
    %v993 = vld [vmem:[%s990 + $0x10] sm:$0xff]
    %v994 = vld [vmem:[%s990 + $0x18] sm:$0xff]
    %v995 = vld [vmem:[%s990 + $0x20] sm:$0xff]
    %v996 = vld [vmem:[%s990 + $0x28] sm:$0xff]
    %v997 = vld [vmem:[%s990 + $0x30] sm:$0xff]
    %v998 = vld [vmem:[%s990 + $0x38] sm:$0xff]
    %v999 = vld [vmem:[%s990 + $0x40] sm:$0xff]
    %v1000 = vld [vmem:[%s990 + $0x48] sm:$0xff]
    %v1001 = vld [vmem:[%s990 + $0x50] sm:$0xff]
    %v1002 = vld [vmem:[%s990 + $0x58] sm:$0xff]
    %v1003 = vld [vmem:[%s990 + $0x60] sm:$0xff]
    %v1004 = vld [vmem:[%s990 + $0x68] sm:$0xff]
    %v1005 = vld [vmem:[%s990 + $0x70] sm:$0xff]
    %v1006 = vld [vmem:[%s990 + $0x78] sm:$0xff]
    %1007 = vmatpush.msra.mxu0 %v1006
    %1008 = vmatpush.msra.mxu0 %v1005
    %1009 = vmatpush.msra.mxu0 %v1004
    %1010 = vmatpush.msra.mxu0 %v1003
    %1011 = vmatpush.msra.mxu0 %v1002
    %1012 = vmatpush.msra.mxu0 %v1001
    %1013 = vmatpush.msra.mxu0 %v1000
    %1014 = vmatpush.msra.mxu0 %v999
    %1015 = vmatpush.msra.mxu0 %v998
    %1016 = vmatpush.msra.mxu0 %v997
    %1017 = vmatpush.msra.mxu0 %v996
    %1018 = vmatpush.msra.mxu0 %v995
    %1019 = vmatpush.msra.mxu0 %v994
    %1020 = vmatpush.msra.mxu0 %v993
    %1021 = vmatpush.msra.mxu0 %v992
    %1022 = vmatpush.msra.mxu0 %v991
    %1023 = vmatmul.f32.gmra.mxu0 %v894
    %v1024 = vpop.f32.mrf.mxu0
    %v1025 = vadd.f32 0.0, %v1024
    %1026 = vmatmul.f32.gmra.mxu0 %v895
    %v1027 = vpop.f32.mrf.mxu0
    %v1028 = vadd.f32 0.0, %v1027
    %1029 = vmatmul.f32.gmra.mxu0 %v896
    %v1030 = vpop.f32.mrf.mxu0
    %v1031 = vadd.f32 0.0, %v1030
    %1032 = vmatmul.f32.gmra.mxu0 %v897
    %v1033 = vpop.f32.mrf.mxu0
    %v1034 = vadd.f32 0.0, %v1033
    %1035 = vdwg.mxu0
    %v1036 = vadd.f32 %v979, %v1025
    %v1037 = vadd.f32 %v982, %v1028
    %v1038 = vadd.f32 %v985, %v1031
    %v1039 = vadd.f32 %v988, %v1034
    %s1040 = scalar_lea.vmem [#allocation8], 4
    %v1041 = vld [vmem:[%s1040] sm:$0x1]
    %v1043 = vperm.slane %v1041, 0
    %v1045 = vadd.f32 %v1036, %v1043
    %v1046 = vadd.f32 %v1037, %v1043
    %v1047 = vadd.f32 %v1038, %v1043
    %v1048 = vadd.f32 %v1039, %v1043
    %vm1049 = vcmp.gt.f32.partialorder %v1045, 0.0
    %vm1050 = vcmp.gt.f32.partialorder %v1046, 0.0
    %vm1051 = vcmp.gt.f32.partialorder %v1047, 0.0
    %vm1052 = vcmp.gt.f32.partialorder %v1048, 0.0
    %v1053 = vmul.f32 %v1045, 0.02
    %v1054 = vmul.f32 %v1046, 0.02
    %v1055 = vmul.f32 %v1047, 0.02
    %v1056 = vmul.f32 %v1048, 0.02
    %v1057 = vsel %vm1049, %v1045, %v1053
    %v1058 = vsel %vm1050, %v1046, %v1054
    %v1059 = vsel %vm1051, %v1047, %v1055
    %v1060 = vsel %vm1052, %v1048, %v1056
    %v1061 = vld [vmem:[#allocation5] sm:$0xff]
    %v1062 = vld [vmem:[#allocation5 + $0x8] sm:$0xff]
    %v1063 = vld [vmem:[#allocation5 + $0x10] sm:$0xff]
    %v1064 = vld [vmem:[#allocation5 + $0x18] sm:$0xff]
    %vm1065 = vcmask 261120
    %v1067 = vsel %vm1065, %v1061, 0
    %v1070 = vsel %vm1065, %v1062, 0
    %v1073 = vsel %vm1065, %v1063, 0
    %v1076 = vsel %vm1065, %v1064, 0
    %1078 = vmatpush.msra.mxu0 0.0
    %1079 = vmatpush.msra.mxu0 0.0
    %1080 = vmatpush.msra.mxu0 0.0
    %1081 = vmatpush.msra.mxu0 0.0
    %1082 = vmatpush.msra.mxu0 0.0
    %1083 = vmatpush.msra.mxu0 0.0
    %1084 = vmatpush.msra.mxu0 0.0
    %1085 = vmatpush.msra.mxu0 0.0
    %1086 = vmatpush.msra.mxu0 0.0
    %1087 = vmatpush.msra.mxu0 0.0
    %1088 = vmatpush.msra.mxu0 0.0
    %1089 = vmatpush.msra.mxu0 0.0
    %1090 = vmatpush.msra.mxu0 %v1060
    %1091 = vmatpush.msra.mxu0 %v1059
    %1092 = vmatpush.msra.mxu0 %v1058
    %1093 = vmatpush.msra.mxu0 %v1057
    %1094 = vmatmul.f32.gmra.mxu0 %v1067
    %v1095 = vpop.f32.mrf.mxu0
    %v1096 = vadd.f32 0.0, %v1095
    %1097 = vmatmul.f32.gmra.mxu0 %v1070
    %v1098 = vpop.f32.mrf.mxu0
    %v1099 = vadd.f32 0.0, %v1098
    %1100 = vmatmul.f32.gmra.mxu0 %v1073
    %v1101 = vpop.f32.mrf.mxu0
    %v1102 = vadd.f32 0.0, %v1101
    %1103 = vmatmul.f32.gmra.mxu0 %v1076
    %v1104 = vpop.f32.mrf.mxu0
    %v1105 = vadd.f32 0.0, %v1104
    %1106 = vdwg.mxu0
    %v1107 = vld [vmem:[#allocation10] sm:$0xff]
    %v1108 = vadd.f32 %v1096, %v1107
    %v1109 = vadd.f32 %v1099, %v1107
    %v1110 = vadd.f32 %v1102, %v1107
    %v1111 = vadd.f32 %v1105, %v1107
    %v1112 = vrot.slane %v1108, 4
    %v1113 = vmax.f32 %v1108, %v1112
    %v1114 = vrot.slane %v1113, 2
    %v1115 = vmax.f32 %v1113, %v1114
    %v1116 = vrot.slane %v1115, 1
    %v1117 = vmax.f32 %v1115, %v1116
    %v1118 = vrot.slane %v1109, 4
    %v1119 = vmax.f32 %v1109, %v1118
    %v1120 = vrot.slane %v1119, 2
    %v1121 = vmax.f32 %v1119, %v1120
    %v1122 = vrot.slane %v1121, 1
    %v1123 = vmax.f32 %v1121, %v1122
    %v1124 = vrot.slane %v1110, 4
    %v1125 = vmax.f32 %v1110, %v1124
    %v1126 = vrot.slane %v1125, 2
    %v1127 = vmax.f32 %v1125, %v1126
    %v1128 = vrot.slane %v1127, 1
    %v1129 = vmax.f32 %v1127, %v1128
    %v1130 = vrot.slane %v1111, 4
    %v1131 = vmax.f32 %v1111, %v1130
    %v1132 = vrot.slane %v1131, 2
    %v1133 = vmax.f32 %v1131, %v1132
    %v1134 = vrot.slane %v1133, 1
    %v1135 = vmax.f32 %v1133, %v1134
    %v1136 = vsub.f32 %v1108, %v1117
    %v1137 = vsub.f32 %v1109, %v1123
    %v1138 = vsub.f32 %v1110, %v1129
    %v1139 = vsub.f32 %v1111, %v1135
    %v1140 = vmul.f32 %v1136, 1.442695
    %v1141 = vpow.pop %v1140
    %v1142 = vmul.f32 %v1137, 1.442695
    %v1143 = vpow.pop %v1142
    %v1144 = vmul.f32 %v1138, 1.442695
    %v1145 = vpow.pop %v1144
    %v1146 = vmul.f32 %v1139, 1.442695
    %v1147 = vpow.pop %v1146
    %v1148 = vrot.slane %v1141, 4
    %v1149 = vadd.f32 %v1141, %v1148
    %v1150 = vrot.slane %v1149, 2
    %v1151 = vadd.f32 %v1149, %v1150
    %v1152 = vrot.slane %v1151, 1
    %v1153 = vadd.f32 %v1151, %v1152
    %v1154 = vrot.slane %v1143, 4
    %v1155 = vadd.f32 %v1143, %v1154
    %v1156 = vrot.slane %v1155, 2
    %v1157 = vadd.f32 %v1155, %v1156
    %v1158 = vrot.slane %v1157, 1
    %v1159 = vadd.f32 %v1157, %v1158
    %v1160 = vrot.slane %v1145, 4
    %v1161 = vadd.f32 %v1145, %v1160
    %v1162 = vrot.slane %v1161, 2
    %v1163 = vadd.f32 %v1161, %v1162
    %v1164 = vrot.slane %v1163, 1
    %v1165 = vadd.f32 %v1163, %v1164
    %v1166 = vrot.slane %v1147, 4
    %v1167 = vadd.f32 %v1147, %v1166
    %v1168 = vrot.slane %v1167, 2
    %v1169 = vadd.f32 %v1167, %v1168
    %v1170 = vrot.slane %v1169, 1
    %v1171 = vadd.f32 %v1169, %v1170
    %v1172 = vrcp.pop %v1153
    %v1173 = vrcp.pop %v1159
    %v1174 = vrcp.pop %v1165
    %v1175 = vrcp.pop %v1171
    %v1176 = vmul.f32 %v1141, %v1172
    %v1177 = vmul.f32 %v1143, %v1173
    %v1178 = vmul.f32 %v1145, %v1174
    %v1179 = vmul.f32 %v1147, %v1175
    %1181 = vset.pattern.permute.xlu0 0
    %1182 = vperm.xlu0 %1181, %v1176
    %v1183 = vpop.permute.xlu0 %1182
    %1186 = vset.pattern.permute.xlu0 0
    %1187 = vperm.xlu0 %1186, %v1177
    %v1188 = vpop.permute.xlu0 %1187
    %1191 = vset.pattern.permute.xlu0 0
    %1192 = vperm.xlu0 %1191, %v1178
    %v1193 = vpop.permute.xlu0 %1192
    %1196 = vset.pattern.permute.xlu0 0
    %1197 = vperm.xlu0 %1196, %v1179
    %v1198 = vpop.permute.xlu0 %1197
    %v1200 = vmul.f32 %v1183, %v97
    %v1201 = vmul.f32 %v1188, %v98
    %v1202 = vmul.f32 %v1193, %v99
    %v1203 = vmul.f32 %v1198, %v100
    %v1204 = vrot.slane %v1200, 4
    %v1205 = vadd.f32 %v1200, %v1204
    %v1206 = vrot.slane %v1205, 2
    %v1207 = vadd.f32 %v1205, %v1206
    %v1208 = vrot.slane %v1207, 1
    %v1209 = vadd.f32 %v1207, %v1208
    %v1210 = vrot.slane %v1201, 4
    %v1211 = vadd.f32 %v1201, %v1210
    %v1212 = vrot.slane %v1211, 2
    %v1213 = vadd.f32 %v1211, %v1212
    %v1214 = vrot.slane %v1213, 1
    %v1215 = vadd.f32 %v1213, %v1214
    %v1216 = vrot.slane %v1202, 4
    %v1217 = vadd.f32 %v1202, %v1216
    %v1218 = vrot.slane %v1217, 2
    %v1219 = vadd.f32 %v1217, %v1218
    %v1220 = vrot.slane %v1219, 1
    %v1221 = vadd.f32 %v1219, %v1220
    %v1222 = vrot.slane %v1203, 4
    %v1223 = vadd.f32 %v1203, %v1222
    %v1224 = vrot.slane %v1223, 2
    %v1225 = vadd.f32 %v1223, %v1224
    %v1226 = vrot.slane %v1225, 1
    %v1227 = vadd.f32 %v1225, %v1226
    %vm1232 = vcmask 1041409
    %v1233 = vsel %vm1232, %v1215, %v1209
    %vm1234 = vcmask 1042434
    %v1235 = vsel %vm1234, %v1221, %v1233
    %vm1236 = vcmask 1043459
    %v1237 = vsel %vm1236, %v1227, %v1235
    %1239 = vst [vmem:[#allocation11] sm:$0xf] %v1237
    // Predicated region
    $region42: #{tpu_custom_call.1} parent=1 // pred_check
      _
    $region43: #{tpu_custom_call.1} parent=1 // pred_check_branch
      %1241 = sbr.rel (0) target = $region45
    $region44: #{tpu_custom_call.1} parent=1 // pred_region
      %1243 = vsyncadd [#allocation4], 0
      %s1245 = sshll.u32 [#allocation11], 4
      %s1246 = int_to_ptr.vmem [resolvable:$true] %s1245
      %s1247 = sshll.u32 %s5, 4
      %s1248 = int_to_ptr.hbm [resolvable:$true] %s1247
      %1250 = dma.vmem_to_hbm [thread:$0]  %s1246, 64, %s1248, [#allocation4]
    $region45: #{tpu_custom_call.1} parent=1 // pred_fallthru
      _
    // Predicated region
    $region46: #{tpu_custom_call.1} parent=1 // pred_check
      _
    $region47: #{tpu_custom_call.1} parent=1 // pred_check_branch
      %1252 = sbr.rel (0) target = $region49
    $region48: #{tpu_custom_call.1} parent=1 // pred_region
      %1254 = dma.done [#allocation4], 64
    $region49: #{tpu_custom_call.1} parent=1 // pred_fallthru
      _
    %1255 = vsyncpa [#allocation3], 1
    %1256 = vsyncpa [#allocation6], 1
    %1257 = vsyncpa [#allocation9], 1
    %1258 = vsyncpa [#allocation4], 1

</llo_original>
